<compile_context>
chip_gen: v6e
topology: v6e:2x2x1
jax: 0.10.0
libtpu: 0.0.40
codegen_flags: <defaults>
</compile_context>

<pallas_src>
import jax
import jax.numpy as jnp
from jax.experimental import pallas as pl
from jax.experimental.pallas import tpu as pltpu

LANE = 128      # TPU lane width (last-dim tiling unit)
SUBLANE = 8


def _round_up(n, m):
    return ((n + m - 1) // m) * m


def bpn_kernel(x_ref, w1_ref, b1_ref, w2_ref, b2_ref, o_ref):
    # x tile (tb, d_i): cast to bf16 for the MXU; accumulate in f32.
    x = x_ref[...].astype(jnp.bfloat16)
    a = jnp.dot(x, w1_ref[...], preferred_element_type=jnp.float32) + b1_ref[...]
    # f32 sigmoid on VPU/EUP.  Padded hidden cols evaluate to sigmoid(0)=0.5 but
    # hit zero rows of the padded W2^T, so they contribute nothing to the output.
    h = jax.nn.sigmoid(a)
    o = jnp.dot(h.astype(jnp.bfloat16), w2_ref[...],
                preferred_element_type=jnp.float32) + b2_ref[...]
    o_ref[...] = o.astype(o_ref.dtype)   # lane-dense (tb, d_o_pad) store


def prepare_params(w1, b1, w2, b2, *, compute_dtype=jnp.bfloat16):
    """One-time parameter prep (outside the hot path): transpose to (in, out)
    layout, zero-pad the lane dims (d_h, d_o) to multiples of 128, cast the
    weight matrices to bf16 for the MXU.  Biases stay f32."""
    d_h, d_i = w1.shape
    d_o = w2.shape[0]
    d_h_p = _round_up(d_h, LANE)
    d_o_p = _round_up(d_o, LANE)

    w1t = jnp.zeros((d_i, d_h_p), compute_dtype).at[:, :d_h].set(
        jnp.asarray(w1).T.astype(compute_dtype))
    w2t = jnp.zeros((d_h_p, d_o_p), compute_dtype).at[:d_h, :d_o].set(
        jnp.asarray(w2).T.astype(compute_dtype))
    b1p = jnp.zeros((1, d_h_p), jnp.float32).at[0, :d_h].set(
        jnp.asarray(b1).astype(jnp.float32))
    b2p = jnp.zeros((1, d_o_p), jnp.float32).at[0, :d_o].set(
        jnp.asarray(b2).astype(jnp.float32))
    return {"w1t": w1t, "b1": b1p, "w2t": w2t, "b2": b2p, "d_o": d_o}


def bpn_forward(x, params, *, tb=512):
    """x: (B, d_i) float32; params from prepare_params(). Returns (B, d_o) f32."""
    B, d_i = x.shape
    w1t, b1, w2t, b2 = params["w1t"], params["b1"], params["w2t"], params["b2"]
    d_h_p = w1t.shape[1]
    d_o_p = w2t.shape[1]
    d_o = params["d_o"]

    # Batch tile: large (amortize per-step overhead), multiple of 8, clamped to B.
    tb = min(tb, B)
    if tb != B:
        tb = max(SUBLANE, (tb // SUBLANE) * SUBLANE)
    grid = (pl.cdiv(B, tb),)

    # VMEM budget (sized against v7x's 64 MiB/TC): double-buffered x & output
    # tiles + resident (double-buffered) weights/biases, with headroom.
    tile_bytes = 2 * (tb * d_i * x.dtype.itemsize + tb * d_o_p * 4)
    weight_bytes = 2 * (w1t.size * w1t.dtype.itemsize
                        + w2t.size * w2t.dtype.itemsize
                        + (d_h_p + d_o_p) * 4)
    vmem_limit = int(min(64 << 20, max(32 << 20, 4 * (tile_bytes + weight_bytes))))

    out_pad = pl.pallas_call(
        bpn_kernel,
        out_shape=jax.ShapeDtypeStruct((B, d_o_p), jnp.float32),
        grid_spec=pltpu.PrefetchScalarGridSpec(
            num_scalar_prefetch=0,
            grid=grid,
            in_specs=[
                pl.BlockSpec((tb, d_i), lambda i: (i, 0)),       # x batch tile
                pl.BlockSpec((d_i, d_h_p), lambda i: (0, 0)),    # W1^T (resident, bf16)
                pl.BlockSpec((1, d_h_p), lambda i: (0, 0)),      # b1  (f32)
                pl.BlockSpec((d_h_p, d_o_p), lambda i: (0, 0)),  # W2^T (resident, bf16)
                pl.BlockSpec((1, d_o_p), lambda i: (0, 0)),      # b2  (f32)
            ],
            out_specs=pl.BlockSpec((tb, d_o_p), lambda i: (i, 0)),  # lane-dense output
        ),
        compiler_params=pltpu.CompilerParams(
            dimension_semantics=("parallel",),   # shards grid steps across v7x's 2 TCs
            vmem_limit_bytes=vmem_limit,
        ),
    )(x, w1t, b1, w2t, b2)

    # Drop the lane padding (cheap: output is tiny relative to the x stream).
    return out_pad[:, :d_o]


if __name__ == "__main__":
    # Shapes consistent with BPN(d_i, d_h, d_o); B large enough for 2 grid steps.
    B, d_i, d_h, d_o = 1024, 16, 32, 8

    key = jax.random.PRNGKey(0)
    kx, kw1, kw2 = jax.random.split(key, 3)

    x = jax.random.normal(kx, (B, d_i), dtype=jnp.float32)

    # Deterministic init mirroring initialize_weights(): weight ~ N(0, 0.02), bias = 0.
    w1 = 0.02 * jax.random.normal(kw1, (d_h, d_i), dtype=jnp.float32)
    b1 = jnp.zeros((d_h,), dtype=jnp.float32)
    w2 = 0.02 * jax.random.normal(kw2, (d_o, d_h), dtype=jnp.float32)
    b2 = jnp.zeros((d_o,), dtype=jnp.float32)

    params = prepare_params(w1, b1, w2, b2)    # one-time prep, outside the hot path
    out = bpn_forward(x, params)
    out = jax.block_until_ready(out)

    # Pure-JAX f32 reference (same math as the PyTorch forward).
    a_ref = x @ w1.T + b1
    h_ref = 1.0 / (1.0 + jnp.exp(-a_ref))
    ref = h_ref @ w2.T + b2

    assert out.shape == (B, d_o)
    # bf16 MXU inputs (f32 accumulation) -> tolerance loosened vs. pure f32.
    assert jnp.allclose(out, ref, atol=1e-2, rtol=1e-2), float(jnp.max(jnp.abs(out - ref)))

    print("KERNEL_OK")
</pallas_src>

<mosaic_0001>
module attributes {stable_mosaic.version = 11 : i64} {
  func.func @bpn_kernel(%arg0: i32, %arg1: memref<512x16xf32, #tpu.memory_space<vmem>>, %arg2: memref<16x128xbf16, #tpu.memory_space<vmem>>, %arg3: memref<1x128xf32, #tpu.memory_space<vmem>>, %arg4: memref<128x128xbf16, #tpu.memory_space<vmem>>, %arg5: memref<1x128xf32, #tpu.memory_space<vmem>>, %arg6: memref<512x128xf32, #tpu.memory_space<vmem>>) attributes {dimension_semantics = [#tpu.dimension_semantics<parallel>], iteration_bounds = array<i64: 2>, scalar_prefetch = 0 : i64, scratch_operands = 0 : i64, tpu.core_type = #tpu.core_type<tc>, window_params = [{transform_indices = @transform_0, window_bounds = array<i64: 512, 16>}, {pipeline_mode = #tpu.pipeline_mode<synchronous>, transform_indices = @transform_1, window_bounds = array<i64: 16, 128>}, {pipeline_mode = #tpu.pipeline_mode<synchronous>, transform_indices = @transform_2, window_bounds = array<i64: 1, 128>}, {pipeline_mode = #tpu.pipeline_mode<synchronous>, transform_indices = @transform_3, window_bounds = array<i64: 128, 128>}, {pipeline_mode = #tpu.pipeline_mode<synchronous>, transform_indices = @transform_4, window_bounds = array<i64: 1, 128>}, {transform_indices = @transform_5, window_bounds = array<i64: 512, 128>}]} {
    %c0 = arith.constant 0 : index
    %c0_0 = arith.constant 0 : index
    %0 = vector.load %arg1[%c0, %c0_0] : memref<512x16xf32, #tpu.memory_space<vmem>>, vector<512x16xf32>
    %1 = arith.truncf %0 : vector<512x16xf32> to vector<512x16xbf16>
    %c0_1 = arith.constant 0 : index
    %c0_2 = arith.constant 0 : index
    %2 = vector.load %arg2[%c0_1, %c0_2] : memref<16x128xbf16, #tpu.memory_space<vmem>>, vector<16x128xbf16>
    %cst = arith.constant dense<0.000000e+00> : vector<512x128xf32>
    %3 = tpu.matmul %1, %2, %cst {dimension_numbers = #tpu.dot_dimension_numbers<[1], [0], [0], [1], [0, 0, 1, 1], [], []>} : vector<512x16xbf16>, vector<16x128xbf16>, vector<512x128xf32> -> vector<512x128xf32>
    %c0_3 = arith.constant 0 : index
    %c0_4 = arith.constant 0 : index
    %4 = vector.load %arg3[%c0_3, %c0_4] : memref<1x128xf32, #tpu.memory_space<vmem>>, vector<1x128xf32>
    %5 = vector.broadcast %4 : vector<1x128xf32> to vector<512x128xf32>
    %6 = arith.addf %3, %5 : vector<512x128xf32>
    %7 = arith.negf %6 : vector<512x128xf32>
    %8 = math.exp %7 : vector<512x128xf32>
    %cst_5 = arith.constant 1.000000e+00 : f32
    %9 = vector.broadcast %cst_5 : f32 to vector<512x128xf32>
    %10 = arith.addf %9, %8 : vector<512x128xf32>
    %11 = arith.divf %9, %10 : vector<512x128xf32>
    %12 = arith.truncf %11 : vector<512x128xf32> to vector<512x128xbf16>
    %c0_6 = arith.constant 0 : index
    %c0_7 = arith.constant 0 : index
    %13 = vector.load %arg4[%c0_6, %c0_7] : memref<128x128xbf16, #tpu.memory_space<vmem>>, vector<128x128xbf16>
    %cst_8 = arith.constant dense<0.000000e+00> : vector<512x128xf32>
    %14 = tpu.matmul %12, %13, %cst_8 {dimension_numbers = #tpu.dot_dimension_numbers<[1], [0], [0], [1], [0, 0, 1, 1], [], []>} : vector<512x128xbf16>, vector<128x128xbf16>, vector<512x128xf32> -> vector<512x128xf32>
    %c0_9 = arith.constant 0 : index
    %c0_10 = arith.constant 0 : index
    %15 = vector.load %arg5[%c0_9, %c0_10] : memref<1x128xf32, #tpu.memory_space<vmem>>, vector<1x128xf32>
    %16 = vector.broadcast %15 : vector<1x128xf32> to vector<512x128xf32>
    %17 = arith.addf %14, %16 : vector<512x128xf32>
    %c0_11 = arith.constant 0 : index
    %c0_12 = arith.constant 0 : index
    %18 = vector.load %arg6[%c0_11, %c0_12] : memref<512x128xf32, #tpu.memory_space<vmem>>, vector<512x128xf32>
    tpu.vector_store %arg6[%c0_11, %c0_12], %17 {strides = array<i32>} : memref<512x128xf32, #tpu.memory_space<vmem>>, vector<512x128xf32>,
    return
  }
  func.func @transform_0(%arg0: i32) -> (i32, i32) {
    %c0_i32 = arith.constant 0 : i32
    %c0_i32_0 = arith.constant 0 : i32
    return %arg0, %c0_i32 : i32, i32
  }
  func.func @transform_1(%arg0: i32) -> (i32, i32) {
    %c0_i32 = arith.constant 0 : i32
    %c0_i32_0 = arith.constant 0 : i32
    %c0_i32_1 = arith.constant 0 : i32
    return %c0_i32, %c0_i32_0 : i32, i32
  }
  func.func @transform_2(%arg0: i32) -> (i32, i32) {
    %c0_i32 = arith.constant 0 : i32
    %c0_i32_0 = arith.constant 0 : i32
    %c0_i32_1 = arith.constant 0 : i32
    return %c0_i32, %c0_i32_0 : i32, i32
  }
  func.func @transform_3(%arg0: i32) -> (i32, i32) {
    %c0_i32 = arith.constant 0 : i32
    %c0_i32_0 = arith.constant 0 : i32
    %c0_i32_1 = arith.constant 0 : i32
    return %c0_i32, %c0_i32_0 : i32, i32
  }
  func.func @transform_4(%arg0: i32) -> (i32, i32) {
    %c0_i32 = arith.constant 0 : i32
    %c0_i32_0 = arith.constant 0 : i32
    %c0_i32_1 = arith.constant 0 : i32
    return %c0_i32, %c0_i32_0 : i32, i32
  }
  func.func @transform_5(%arg0: i32) -> (i32, i32) {
    %c0_i32 = arith.constant 0 : i32
    %c0_i32_0 = arith.constant 0 : i32
    return %arg0, %c0_i32 : i32, i32
  }
}

</mosaic_0001>

<llo_original>
// kernel: tpu_custom_call.1
$region0: #{tpu_custom_call.1}
  #allocation0 [shape = 'u32[]', space=smem, size = 0x4, offset = 0x4, fixed_abs, tag = 'smem constant byte address 0x4 - core index']
  #allocation1 [shape = 'u32[144,128]{1,0:T(1,128)}', space=vmem, size = 0x12000, scoped, tag = 'internal scratch']
  %s0 = inlined_call_operand.vmem [shape: f32[1024,16], index: 0, kind: input, shape index: {}]
  %s1 = inlined_call_operand.vmem [shape: bf16[16,128], index: 1, kind: input, shape index: {}]
  %s2 = inlined_call_operand.vmem [shape: f32[1,128], index: 2, kind: input, shape index: {}]
  %s3 = inlined_call_operand.vmem [shape: bf16[128,128], index: 3, kind: input, shape index: {}]
  %s4 = inlined_call_operand.vmem [shape: f32[1,128], index: 4, kind: input, shape index: {}]
  %s5 = inlined_call_operand.hbm [shape: f32[1024,128], index: 5, kind: output, shape index: {}]
  %s6 = sld [smem:[#allocation0]]
  $region53: #{tpu_custom_call.1} parent=0
    _
  %s8 = ssub.s32 1, %s6
  %s9 = scalar_select 0, %s8, %s6
  $region1: #{tpu_custom_call.1} parent=0
    #allocation2 [shape = 'u8[524288]{0}', space=vmem, size = 0x80000, scoped, tag = 'output window, operand 0']
    #allocation3 [shape = 's32[2]{0}', space=sflag, size = 0x8, scoped, tag = 'scoped memory for tpu_custom_call.1']
    %10 = vsyncpa [#allocation3], 0
    %s11 = scalar_lea.sflag [#allocation3], 1
    %12 = vsyncpa %s11, 0
    loop: start=0, step=1, limit=4
    $region2: #{tpu_custom_call.1} parent=1 // loop_pre_header
      _
    $region3: #{tpu_custom_call.1} parent=1 // loop_header
      %s14 = sphi 0, %s18
      %p15 = scmp.ge.s32.totalorder %s14, 4
      %s24 = sphi 0, %s26
      %s27 = sphi 0, %s24
      %s28 = sphi 0, %s27
      %s44 = sphi 0, %s28
      %s48 = sphi 0, %s48
      %s50 = sphi 0, %s48
      %s51 = sphi 0, %s50
      %s65 = sphi 0, %s51
      %s69 = sphi 0, %s69
      %s71 = sphi 0, %s69
      %s72 = sphi 0, %s71
      %s86 = sphi 0, %s72
      %s90 = sphi 0, %s90
      %s92 = sphi 0, %s90
      %s93 = sphi 0, %s92
      %s107 = sphi 0, %s93
      %s111 = sphi 0, %s111
      %s113 = sphi 0, %s111
      %s114 = sphi 0, %s113
      %s128 = sphi 0, %s114
      %s134 = sphi 0, %s136
      %s137 = sphi 0, %s134
      %s138 = sphi 0, %s137
      %s154 = sphi 0, %s138
    $region4: #{tpu_custom_call.1} parent=1 // loop_header_branch
      %17 = sbr.rel (%p15) target = $region8
    $region5: #{tpu_custom_call.1} parent=1 // loop_body
      %s19 = ssub.s32 %s14, 1
      %s20 = ssub.s32 %s14, 2
      %s21 = sadd.s32 %s14, 1
      %s22 = ssub.s32 %s14, %s21
      %p23 = scmp.eq.s32.totalorder %s22, 0
      %s25 = sadd.s32 %s24, 1
      %s26 = scalar_select %p23, %s24, %s25
      %p29 = pneg %p23
      %p30 = scmp.eq.s32.totalorder %s14, 1
      %p31 = por %p29, %p30
      %p32 = scmp.ne.s32.totalorder %s24, %s27
      %p33 = scmp.eq.s32.totalorder %s14, 0
      %p34 = por %p32, %p33
      %p35 = scmp.ne.s32.totalorder %s24, %s27
      %p36 = scmp.eq.s32.totalorder %s19, 1
      %p37 = por %p35, %p36
      %p38 = scmp.ne.s32.totalorder %s27, %s28
      %p39 = scmp.eq.s32.totalorder %s19, 0
      %p40 = por %p38, %p39
      %p41 = scmp.ne.s32.totalorder %s27, %s28
      %p42 = scmp.eq.s32.totalorder %s20, 1
      %p43 = por %p41, %p42
      %p45 = scmp.ne.s32.totalorder %s28, %s44
      %p46 = scmp.eq.s32.totalorder %s20, 0
      %p47 = por %p45, %p46
      %s49 = sadd.s32 %s48, 1
      %p52 = scmp.eq.s32.totalorder %s14, 1
      %p53 = scmp.ne.s32.totalorder %s48, %s50
      %p54 = scmp.eq.s32.totalorder %s14, 0
      %p55 = por %p53, %p54
      %p56 = scmp.ne.s32.totalorder %s48, %s50
      %p57 = scmp.eq.s32.totalorder %s19, 1
      %p58 = por %p56, %p57
      %p59 = scmp.ne.s32.totalorder %s50, %s51
      %p60 = scmp.eq.s32.totalorder %s19, 0
      %p61 = por %p59, %p60
      %p62 = scmp.ne.s32.totalorder %s50, %s51
      %p63 = scmp.eq.s32.totalorder %s20, 1
      %p64 = por %p62, %p63
      %p66 = scmp.ne.s32.totalorder %s51, %s65
      %p67 = scmp.eq.s32.totalorder %s20, 0
      %p68 = por %p66, %p67
      %s70 = sadd.s32 %s69, 1
      %p73 = scmp.eq.s32.totalorder %s14, 1
      %p74 = scmp.ne.s32.totalorder %s69, %s71
      %p75 = scmp.eq.s32.totalorder %s14, 0
      %p76 = por %p74, %p75
      %p77 = scmp.ne.s32.totalorder %s69, %s71
      %p78 = scmp.eq.s32.totalorder %s19, 1
      %p79 = por %p77, %p78
      %p80 = scmp.ne.s32.totalorder %s71, %s72
      %p81 = scmp.eq.s32.totalorder %s19, 0
      %p82 = por %p80, %p81
      %p83 = scmp.ne.s32.totalorder %s71, %s72
      %p84 = scmp.eq.s32.totalorder %s20, 1
      %p85 = por %p83, %p84
      %p87 = scmp.ne.s32.totalorder %s72, %s86
      %p88 = scmp.eq.s32.totalorder %s20, 0
      %p89 = por %p87, %p88
      %s91 = sadd.s32 %s90, 1
      %p94 = scmp.eq.s32.totalorder %s14, 1
      %p95 = scmp.ne.s32.totalorder %s90, %s92
      %p96 = scmp.eq.s32.totalorder %s14, 0
      %p97 = por %p95, %p96
      %p98 = scmp.ne.s32.totalorder %s90, %s92
      %p99 = scmp.eq.s32.totalorder %s19, 1
      %p100 = por %p98, %p99
      %p101 = scmp.ne.s32.totalorder %s92, %s93
      %p102 = scmp.eq.s32.totalorder %s19, 0
      %p103 = por %p101, %p102
      %p104 = scmp.ne.s32.totalorder %s92, %s93
      %p105 = scmp.eq.s32.totalorder %s20, 1
      %p106 = por %p104, %p105
      %p108 = scmp.ne.s32.totalorder %s93, %s107
      %p109 = scmp.eq.s32.totalorder %s20, 0
      %p110 = por %p108, %p109
      %s112 = sadd.s32 %s111, 1
      %p115 = scmp.eq.s32.totalorder %s14, 1
      %p116 = scmp.ne.s32.totalorder %s111, %s113
      %p117 = scmp.eq.s32.totalorder %s14, 0
      %p118 = por %p116, %p117
      %p119 = scmp.ne.s32.totalorder %s111, %s113
      %p120 = scmp.eq.s32.totalorder %s19, 1
      %p121 = por %p119, %p120
      %p122 = scmp.ne.s32.totalorder %s113, %s114
      %p123 = scmp.eq.s32.totalorder %s19, 0
      %p124 = por %p122, %p123
      %p125 = scmp.ne.s32.totalorder %s113, %s114
      %p126 = scmp.eq.s32.totalorder %s20, 1
      %p127 = por %p125, %p126
      %p129 = scmp.ne.s32.totalorder %s114, %s128
      %p130 = scmp.eq.s32.totalorder %s20, 0
      %p131 = por %p129, %p130
      %s132 = ssub.s32 %s14, %s21
      %p133 = scmp.eq.s32.totalorder %s132, 0
      %s135 = sadd.s32 %s134, 1
      %s136 = scalar_select %p133, %s134, %s135
      %p139 = pneg %p133
      %p140 = scmp.eq.s32.totalorder %s14, 1
      %p141 = por %p139, %p140
      %p142 = scmp.ne.s32.totalorder %s134, %s137
      %p143 = scmp.eq.s32.totalorder %s14, 0
      %p144 = por %p142, %p143
      %p145 = scmp.ne.s32.totalorder %s134, %s137
      %p146 = scmp.eq.s32.totalorder %s19, 1
      %p147 = por %p145, %p146
      %p148 = scmp.ne.s32.totalorder %s137, %s138
      %p149 = scmp.eq.s32.totalorder %s19, 0
      %p150 = por %p148, %p149
      %p151 = scmp.ne.s32.totalorder %s137, %s138
      %p152 = scmp.eq.s32.totalorder %s20, 1
      %p153 = por %p151, %p152
      %p155 = scmp.ne.s32.totalorder %s138, %s154
      %p156 = scmp.eq.s32.totalorder %s20, 0
      %p157 = por %p155, %p156
      %p158 = scmp.le.s32.totalorder 1, %s14
      %p159 = scmp.lt.s32.totalorder %s14, 3
      %p160 = pnand %p158, %p159
      %p161 = pneg %p160
      // Predicated region
      $region9: #{tpu_custom_call.1} parent=5 // pred_check
        _
      $region10: #{tpu_custom_call.1} parent=5 // pred_check_branch
        %163 = sbr.rel (%p160) target = $region12
      $region11: #{tpu_custom_call.1} parent=5 // pred_region
        %s164 = ssub.s32 %s14, 1
        // Predicated region
        $region13: #{tpu_custom_call.1} parent=11 // pred_check
          %p165 = pneg %p61
        $region14: #{tpu_custom_call.1} parent=11 // pred_check_branch
          %167 = sbr.rel (%p165) target = $region16
        $region15: #{tpu_custom_call.1} parent=11 // pred_region
          _
        $region16: #{tpu_custom_call.1} parent=11 // pred_fallthru
          _
        // Predicated region
        $region17: #{tpu_custom_call.1} parent=11 // pred_check
          %p168 = pneg %p82
        $region18: #{tpu_custom_call.1} parent=11 // pred_check_branch
          %170 = sbr.rel (%p168) target = $region20
        $region19: #{tpu_custom_call.1} parent=11 // pred_region
          _
        $region20: #{tpu_custom_call.1} parent=11 // pred_fallthru
          _
        // Predicated region
        $region21: #{tpu_custom_call.1} parent=11 // pred_check
          %p171 = pneg %p103
        $region22: #{tpu_custom_call.1} parent=11 // pred_check_branch
          %173 = sbr.rel (%p171) target = $region24
        $region23: #{tpu_custom_call.1} parent=11 // pred_region
          _
        $region24: #{tpu_custom_call.1} parent=11 // pred_fallthru
          _
        // Predicated region
        $region25: #{tpu_custom_call.1} parent=11 // pred_check
          %p174 = pneg %p124
        $region26: #{tpu_custom_call.1} parent=11 // pred_check_branch
          %176 = sbr.rel (%p174) target = $region28
        $region27: #{tpu_custom_call.1} parent=11 // pred_region
          _
        $region28: #{tpu_custom_call.1} parent=11 // pred_fallthru
          _
      $region12: #{tpu_custom_call.1} parent=5 // pred_fallthru
        _
      %p177 = scmp.lt.s32.totalorder %s14, 2
      // Predicated region
      $region29: #{tpu_custom_call.1} parent=5 // pred_check
        %p178 = pneg %p177
      $region30: #{tpu_custom_call.1} parent=5 // pred_check_branch
        %180 = sbr.rel (%p178) target = $region32
      $region31: #{tpu_custom_call.1} parent=5 // pred_region
        // Predicated region
        $region33: #{tpu_custom_call.1} parent=31 // pred_check
          %p181 = pneg %p34
        $region34: #{tpu_custom_call.1} parent=31 // pred_check_branch
          %183 = sbr.rel (%p181) target = $region36
        $region35: #{tpu_custom_call.1} parent=31 // pred_region
          %s184 = smul.u32 64, %s14
          %p185 = scmp.lt.s32.totalorder %s184, 127
          %s186 = scalar_select %p185, %s184, 127
          %s187 = smul.addr %s186, 8
          %s188 = scalar_lea.vmem %s0, %s187
          %s189 = smul.u32 64, %s14
        $region36: #{tpu_custom_call.1} parent=31 // pred_fallthru
          _
      $region32: #{tpu_custom_call.1} parent=5 // pred_fallthru
        _
      %p190 = scmp.le.s32.totalorder 1, %s14
      %p191 = scmp.lt.s32.totalorder %s14, 3
      %p192 = pnand %p190, %p191
      %p193 = pneg %p192
      // Predicated region
      $region37: #{tpu_custom_call.1} parent=5 // pred_check
        _
      $region38: #{tpu_custom_call.1} parent=5 // pred_check_branch
        %195 = sbr.rel (%p192) target = $region40
      $region39: #{tpu_custom_call.1} parent=5 // pred_region
        %s196 = ssub.s32 %s14, 1
        %s197 = smul.u32 64, %s19
        %p198 = scmp.lt.s32.totalorder %s197, 127
        %s199 = scalar_select %p198, %s197, 127
        %s200 = smul.addr %s199, 8
        %s201 = scalar_lea.vmem %s0, %s200
        %p202 = pneg %p40
        %p203 = pneg %p37
        %p204 = pneg %p61
        %p205 = pneg %p58
        %p206 = pneg %p82
        %p207 = pneg %p79
        %p208 = pneg %p103
        %p209 = pneg %p100
        %p210 = pneg %p124
        %p211 = pneg %p121
        %p212 = pneg %p150
        %p213 = pneg %p147
        %s214 = sand.u32 %s137, 1
        %s215 = scalar_lea.sflag [#allocation3], %s214
        %s216 = sand.u32 %s137, 1
        %s217 = smul.addr %s216, 512
        %s218 = scalar_lea.vmem [#allocation2], %s217
        %s219 = smul.u32 64, %s19
        %p220 = scmp.lt.s32.totalorder %s219, 127
        %s221 = scalar_select %p220, %s219, 127
        %s222 = smul.addr %s221, 8
        %s223 = scalar_lea.vmem %s0, %s222
        %s224 = smul.u32 64, %s19
        %s225 = smul.u32 64, %s19
        %v227 = vld [vmem:[%s223] sm:$0xff]
        %v228 = vld [vmem:[%s223 + $0x8] sm:$0xff]
        %v229 = vld [vmem:[%s223 + $0x10] sm:$0xff]
        %v230 = vld [vmem:[%s223 + $0x18] sm:$0xff]
        %v231 = vld [vmem:[%s223 + $0x20] sm:$0xff]
        %v232 = vld [vmem:[%s223 + $0x28] sm:$0xff]
        %v233 = vld [vmem:[%s223 + $0x30] sm:$0xff]
        %v234 = vld [vmem:[%s223 + $0x38] sm:$0xff]
        %v235 = vld [vmem:[%s223 + $0x40] sm:$0xff]
        %v236 = vld [vmem:[%s223 + $0x48] sm:$0xff]
        %v237 = vld [vmem:[%s223 + $0x50] sm:$0xff]
        %v238 = vld [vmem:[%s223 + $0x58] sm:$0xff]
        %v239 = vld [vmem:[%s223 + $0x60] sm:$0xff]
        %v240 = vld [vmem:[%s223 + $0x68] sm:$0xff]
        %v241 = vld [vmem:[%s223 + $0x70] sm:$0xff]
        %v242 = vld [vmem:[%s223 + $0x78] sm:$0xff]
        %v243 = vld [vmem:[%s223 + $0x80] sm:$0xff]
        %v244 = vld [vmem:[%s223 + $0x88] sm:$0xff]
        %v245 = vld [vmem:[%s223 + $0x90] sm:$0xff]
        %v246 = vld [vmem:[%s223 + $0x98] sm:$0xff]
        %v247 = vld [vmem:[%s223 + $0xa0] sm:$0xff]
        %v248 = vld [vmem:[%s223 + $0xa8] sm:$0xff]
        %v249 = vld [vmem:[%s223 + $0xb0] sm:$0xff]
        %v250 = vld [vmem:[%s223 + $0xb8] sm:$0xff]
        %v251 = vld [vmem:[%s223 + $0xc0] sm:$0xff]
        %v252 = vld [vmem:[%s223 + $0xc8] sm:$0xff]
        %v253 = vld [vmem:[%s223 + $0xd0] sm:$0xff]
        %v254 = vld [vmem:[%s223 + $0xd8] sm:$0xff]
        %v255 = vld [vmem:[%s223 + $0xe0] sm:$0xff]
        %v256 = vld [vmem:[%s223 + $0xe8] sm:$0xff]
        %v257 = vld [vmem:[%s223 + $0xf0] sm:$0xff]
        %v258 = vld [vmem:[%s223 + $0xf8] sm:$0xff]
        %v259 = vld [vmem:[%s223 + $0x100] sm:$0xff]
        %v260 = vld [vmem:[%s223 + $0x108] sm:$0xff]
        %v261 = vld [vmem:[%s223 + $0x110] sm:$0xff]
        %v262 = vld [vmem:[%s223 + $0x118] sm:$0xff]
        %v263 = vld [vmem:[%s223 + $0x120] sm:$0xff]
        %v264 = vld [vmem:[%s223 + $0x128] sm:$0xff]
        %v265 = vld [vmem:[%s223 + $0x130] sm:$0xff]
        %v266 = vld [vmem:[%s223 + $0x138] sm:$0xff]
        %v267 = vld [vmem:[%s223 + $0x140] sm:$0xff]
        %v268 = vld [vmem:[%s223 + $0x148] sm:$0xff]
        %v269 = vld [vmem:[%s223 + $0x150] sm:$0xff]
        %v270 = vld [vmem:[%s223 + $0x158] sm:$0xff]
        %v271 = vld [vmem:[%s223 + $0x160] sm:$0xff]
        %v272 = vld [vmem:[%s223 + $0x168] sm:$0xff]
        %v273 = vld [vmem:[%s223 + $0x170] sm:$0xff]
        %v274 = vld [vmem:[%s223 + $0x178] sm:$0xff]
        %v275 = vld [vmem:[%s223 + $0x180] sm:$0xff]
        %v276 = vld [vmem:[%s223 + $0x188] sm:$0xff]
        %v277 = vld [vmem:[%s223 + $0x190] sm:$0xff]
        %v278 = vld [vmem:[%s223 + $0x198] sm:$0xff]
        %v279 = vld [vmem:[%s223 + $0x1a0] sm:$0xff]
        %v280 = vld [vmem:[%s223 + $0x1a8] sm:$0xff]
        %v281 = vld [vmem:[%s223 + $0x1b0] sm:$0xff]
        %v282 = vld [vmem:[%s223 + $0x1b8] sm:$0xff]
        %v283 = vld [vmem:[%s223 + $0x1c0] sm:$0xff]
        %v284 = vld [vmem:[%s223 + $0x1c8] sm:$0xff]
        %v285 = vld [vmem:[%s223 + $0x1d0] sm:$0xff]
        %v286 = vld [vmem:[%s223 + $0x1d8] sm:$0xff]
        %v287 = vld [vmem:[%s223 + $0x1e0] sm:$0xff]
        %v288 = vld [vmem:[%s223 + $0x1e8] sm:$0xff]
        %v289 = vld [vmem:[%s223 + $0x1f0] sm:$0xff]
        %v290 = vld [vmem:[%s223 + $0x1f8] sm:$0xff]
        %v291 = vpack.c.bf16 %v228, %v227
        %v292 = vpack.c.bf16 %v230, %v229
        %v293 = vpack.c.bf16 %v232, %v231
        %v294 = vpack.c.bf16 %v234, %v233
        %v295 = vpack.c.bf16 %v236, %v235
        %v296 = vpack.c.bf16 %v238, %v237
        %v297 = vpack.c.bf16 %v240, %v239
        %v298 = vpack.c.bf16 %v242, %v241
        %v299 = vpack.c.bf16 %v244, %v243
        %v300 = vpack.c.bf16 %v246, %v245
        %v301 = vpack.c.bf16 %v248, %v247
        %v302 = vpack.c.bf16 %v250, %v249
        %v303 = vpack.c.bf16 %v252, %v251
        %v304 = vpack.c.bf16 %v254, %v253
        %v305 = vpack.c.bf16 %v256, %v255
        %v306 = vpack.c.bf16 %v258, %v257
        %v307 = vpack.c.bf16 %v260, %v259
        %v308 = vpack.c.bf16 %v262, %v261
        %v309 = vpack.c.bf16 %v264, %v263
        %v310 = vpack.c.bf16 %v266, %v265
        %v311 = vpack.c.bf16 %v268, %v267
        %v312 = vpack.c.bf16 %v270, %v269
        %v313 = vpack.c.bf16 %v272, %v271
        %v314 = vpack.c.bf16 %v274, %v273
        %v315 = vpack.c.bf16 %v276, %v275
        %v316 = vpack.c.bf16 %v278, %v277
        %v317 = vpack.c.bf16 %v280, %v279
        %v318 = vpack.c.bf16 %v282, %v281
        %v319 = vpack.c.bf16 %v284, %v283
        %v320 = vpack.c.bf16 %v286, %v285
        %v321 = vpack.c.bf16 %v288, %v287
        %v322 = vpack.c.bf16 %v290, %v289
        %v323 = vld [vmem:[%s1] sm:$0xf]
        %v324 = vld [vmem:[%s1 + $0x4] sm:$0xf]
        %v325 = vld [vmem:[%s2] sm:$0x1]
        %v327 = vlaneseq
        %v328 = vshrl.u32 %v327, 7
        %v329 = vsub.s32 0, %v328
        %v330 = vrot.slane %v325, %v329
        %v334 = vunpack.c.l.b16 %v323
        %v335 = vunpack.c.l.b16 %v324
        %v336 = vpack.c.b16 %v335, %v334
        %vm338 = vcmask 130048
        %v340 = vsel %vm338, %v291, 0
        %v343 = vsel %vm338, %v292, 0
        %v346 = vsel %vm338, %v293, 0
        %v349 = vsel %vm338, %v294, 0
        %v352 = vsel %vm338, %v295, 0
        %v355 = vsel %vm338, %v296, 0
        %v358 = vsel %vm338, %v297, 0
        %v361 = vsel %vm338, %v298, 0
        %v364 = vsel %vm338, %v299, 0
        %v367 = vsel %vm338, %v300, 0
        %v370 = vsel %vm338, %v301, 0
        %v373 = vsel %vm338, %v302, 0
        %v376 = vsel %vm338, %v303, 0
        %v379 = vsel %vm338, %v304, 0
        %v382 = vsel %vm338, %v305, 0
        %v385 = vsel %vm338, %v306, 0
        %v388 = vsel %vm338, %v307, 0
        %v391 = vsel %vm338, %v308, 0
        %v394 = vsel %vm338, %v309, 0
        %v397 = vsel %vm338, %v310, 0
        %v400 = vsel %vm338, %v311, 0
        %v403 = vsel %vm338, %v312, 0
        %v406 = vsel %vm338, %v313, 0
        %v409 = vsel %vm338, %v314, 0
        %v412 = vsel %vm338, %v315, 0
        %v415 = vsel %vm338, %v316, 0
        %v418 = vsel %vm338, %v317, 0
        %v421 = vsel %vm338, %v318, 0
        %v424 = vsel %vm338, %v319, 0
        %v427 = vsel %vm338, %v320, 0
        %v430 = vsel %vm338, %v321, 0
        %v433 = vsel %vm338, %v322, 0
        %435 = vmatprep.subr.bf16.mxu0 0
        %436 = vmatpush1.bf16.msra.mxu0 0
        %437 = vmatprep.subr.bf16.mxu0 0
        %438 = vmatpush1.bf16.msra.mxu0 0
        %439 = vmatprep.subr.bf16.mxu0 0
        %440 = vmatpush1.bf16.msra.mxu0 0
        %441 = vmatprep.subr.bf16.mxu0 0
        %442 = vmatpush1.bf16.msra.mxu0 0
        %443 = vmatprep.subr.bf16.mxu0 0
        %444 = vmatpush1.bf16.msra.mxu0 0
        %445 = vmatprep.subr.bf16.mxu0 0
        %446 = vmatpush1.bf16.msra.mxu0 0
        %447 = vmatprep.subr.bf16.mxu0 0
        %448 = vmatpush1.bf16.msra.mxu0 0
        %449 = vmatprep.subr.bf16.mxu0 0
        %450 = vmatpush1.bf16.msra.mxu0 %v336
        %451 = vmatprep.subr.bf16.mxu0 0
        %452 = vmatpush2.bf16.msra.mxu0 0
        %453 = vmatprep.subr.bf16.mxu0 0
        %454 = vmatpush2.bf16.msra.mxu0 0
        %455 = vmatprep.subr.bf16.mxu0 0
        %456 = vmatpush2.bf16.msra.mxu0 0
        %457 = vmatprep.subr.bf16.mxu0 0
        %458 = vmatpush2.bf16.msra.mxu0 0
        %459 = vmatprep.subr.bf16.mxu0 0
        %460 = vmatpush2.bf16.msra.mxu0 0
        %461 = vmatprep.subr.bf16.mxu0 0
        %462 = vmatpush2.bf16.msra.mxu0 0
        %463 = vmatprep.subr.bf16.mxu0 0
        %464 = vmatpush2.bf16.msra.mxu0 0
        %465 = vmatprep.subr.bf16.mxu0 0
        %466 = vmatpush2.bf16.msra.mxu0 0
        %467 = vmatprep.mubr.bf16.mxu0 0
        %468 = vmatmul.mubr.bf16.gmra.mxu0 %v340
        %v469 = vpop.f32.mrf.mxu0
        %v470 = vadd.f32 %v330, %v469
        %v471 = vpop.f32.mrf.mxu0
        %v472 = vpop.f32.mrf.mxu0
        %v473 = vadd.f32 %v330, %v472
        %v474 = vpop.f32.mrf.mxu0
        %475 = vmatprep.mubr.bf16.mxu0 0
        %476 = vmatmul.mubr.bf16.gmra.mxu0 %v343
        %v477 = vpop.f32.mrf.mxu0
        %v478 = vadd.f32 %v330, %v477
        %v479 = vpop.f32.mrf.mxu0
        %v480 = vpop.f32.mrf.mxu0
        %v481 = vadd.f32 %v330, %v480
        %v482 = vpop.f32.mrf.mxu0
        %483 = vmatprep.mubr.bf16.mxu0 0
        %484 = vmatmul.mubr.bf16.gmra.mxu0 %v346
        %v485 = vpop.f32.mrf.mxu0
        %v486 = vadd.f32 %v330, %v485
        %v487 = vpop.f32.mrf.mxu0
        %v488 = vpop.f32.mrf.mxu0
        %v489 = vadd.f32 %v330, %v488
        %v490 = vpop.f32.mrf.mxu0
        %491 = vmatprep.mubr.bf16.mxu0 0
        %492 = vmatmul.mubr.bf16.gmra.mxu0 %v349
        %v493 = vpop.f32.mrf.mxu0
        %v494 = vadd.f32 %v330, %v493
        %v495 = vpop.f32.mrf.mxu0
        %v496 = vpop.f32.mrf.mxu0
        %v497 = vadd.f32 %v330, %v496
        %v498 = vpop.f32.mrf.mxu0
        %499 = vmatprep.mubr.bf16.mxu0 0
        %500 = vmatmul.mubr.bf16.gmra.mxu0 %v352
        %v501 = vpop.f32.mrf.mxu0
        %v502 = vadd.f32 %v330, %v501
        %v503 = vpop.f32.mrf.mxu0
        %v504 = vpop.f32.mrf.mxu0
        %v505 = vadd.f32 %v330, %v504
        %v506 = vpop.f32.mrf.mxu0
        %507 = vmatprep.mubr.bf16.mxu0 0
        %508 = vmatmul.mubr.bf16.gmra.mxu0 %v355
        %v509 = vpop.f32.mrf.mxu0
        %v510 = vadd.f32 %v330, %v509
        %v511 = vpop.f32.mrf.mxu0
        %v512 = vpop.f32.mrf.mxu0
        %v513 = vadd.f32 %v330, %v512
        %v514 = vpop.f32.mrf.mxu0
        %515 = vmatprep.mubr.bf16.mxu0 0
        %516 = vmatmul.mubr.bf16.gmra.mxu0 %v358
        %v517 = vpop.f32.mrf.mxu0
        %v518 = vadd.f32 %v330, %v517
        %v519 = vpop.f32.mrf.mxu0
        %v520 = vpop.f32.mrf.mxu0
        %v521 = vadd.f32 %v330, %v520
        %v522 = vpop.f32.mrf.mxu0
        %523 = vmatprep.mubr.bf16.mxu0 0
        %524 = vmatmul.mubr.bf16.gmra.mxu0 %v361
        %v525 = vpop.f32.mrf.mxu0
        %v526 = vadd.f32 %v330, %v525
        %v527 = vpop.f32.mrf.mxu0
        %v528 = vpop.f32.mrf.mxu0
        %v529 = vadd.f32 %v330, %v528
        %v530 = vpop.f32.mrf.mxu0
        %531 = vmatprep.mubr.bf16.mxu0 0
        %532 = vmatmul.mubr.bf16.gmra.mxu0 %v364
        %v533 = vpop.f32.mrf.mxu0
        %v534 = vadd.f32 %v330, %v533
        %v535 = vpop.f32.mrf.mxu0
        %v536 = vpop.f32.mrf.mxu0
        %v537 = vadd.f32 %v330, %v536
        %v538 = vpop.f32.mrf.mxu0
        %539 = vmatprep.mubr.bf16.mxu0 0
        %540 = vmatmul.mubr.bf16.gmra.mxu0 %v367
        %v541 = vpop.f32.mrf.mxu0
        %v542 = vadd.f32 %v330, %v541
        %v543 = vpop.f32.mrf.mxu0
        %v544 = vpop.f32.mrf.mxu0
        %v545 = vadd.f32 %v330, %v544
        %v546 = vpop.f32.mrf.mxu0
        %547 = vmatprep.mubr.bf16.mxu0 0
        %548 = vmatmul.mubr.bf16.gmra.mxu0 %v370
        %v549 = vpop.f32.mrf.mxu0
        %v550 = vadd.f32 %v330, %v549
        %v551 = vpop.f32.mrf.mxu0
        %v552 = vpop.f32.mrf.mxu0
        %v553 = vadd.f32 %v330, %v552
        %v554 = vpop.f32.mrf.mxu0
        %555 = vmatprep.mubr.bf16.mxu0 0
        %556 = vmatmul.mubr.bf16.gmra.mxu0 %v373
        %v557 = vpop.f32.mrf.mxu0
        %v558 = vadd.f32 %v330, %v557
        %v559 = vpop.f32.mrf.mxu0
        %v560 = vpop.f32.mrf.mxu0
        %v561 = vadd.f32 %v330, %v560
        %v562 = vpop.f32.mrf.mxu0
        %563 = vmatprep.mubr.bf16.mxu0 0
        %564 = vmatmul.mubr.bf16.gmra.mxu0 %v376
        %v565 = vpop.f32.mrf.mxu0
        %v566 = vadd.f32 %v330, %v565
        %v567 = vpop.f32.mrf.mxu0
        %v568 = vpop.f32.mrf.mxu0
        %v569 = vadd.f32 %v330, %v568
        %v570 = vpop.f32.mrf.mxu0
        %571 = vmatprep.mubr.bf16.mxu0 0
        %572 = vmatmul.mubr.bf16.gmra.mxu0 %v379
        %v573 = vpop.f32.mrf.mxu0
        %v574 = vadd.f32 %v330, %v573
        %v575 = vpop.f32.mrf.mxu0
        %v576 = vpop.f32.mrf.mxu0
        %v577 = vadd.f32 %v330, %v576
        %v578 = vpop.f32.mrf.mxu0
        %579 = vmatprep.mubr.bf16.mxu0 0
        %580 = vmatmul.mubr.bf16.gmra.mxu0 %v382
        %v581 = vpop.f32.mrf.mxu0
        %v582 = vadd.f32 %v330, %v581
        %v583 = vpop.f32.mrf.mxu0
        %v584 = vpop.f32.mrf.mxu0
        %v585 = vadd.f32 %v330, %v584
        %v586 = vpop.f32.mrf.mxu0
        %587 = vmatprep.mubr.bf16.mxu0 0
        %588 = vmatmul.mubr.bf16.gmra.mxu0 %v385
        %v589 = vpop.f32.mrf.mxu0
        %v590 = vadd.f32 %v330, %v589
        %v591 = vpop.f32.mrf.mxu0
        %v592 = vpop.f32.mrf.mxu0
        %v593 = vadd.f32 %v330, %v592
        %v594 = vpop.f32.mrf.mxu0
        %595 = vmatprep.mubr.bf16.mxu0 0
        %596 = vmatmul.mubr.bf16.gmra.mxu0 %v388
        %v597 = vpop.f32.mrf.mxu0
        %v598 = vadd.f32 %v330, %v597
        %v599 = vpop.f32.mrf.mxu0
        %v600 = vpop.f32.mrf.mxu0
        %v601 = vadd.f32 %v330, %v600
        %v602 = vpop.f32.mrf.mxu0
        %603 = vmatprep.mubr.bf16.mxu0 0
        %604 = vmatmul.mubr.bf16.gmra.mxu0 %v391
        %v605 = vpop.f32.mrf.mxu0
        %v606 = vadd.f32 %v330, %v605
        %v607 = vpop.f32.mrf.mxu0
        %v608 = vpop.f32.mrf.mxu0
        %v609 = vadd.f32 %v330, %v608
        %v610 = vpop.f32.mrf.mxu0
        %611 = vmatprep.mubr.bf16.mxu0 0
        %612 = vmatmul.mubr.bf16.gmra.mxu0 %v394
        %v613 = vpop.f32.mrf.mxu0
        %v614 = vadd.f32 %v330, %v613
        %v615 = vpop.f32.mrf.mxu0
        %v616 = vpop.f32.mrf.mxu0
        %v617 = vadd.f32 %v330, %v616
        %v618 = vpop.f32.mrf.mxu0
        %619 = vmatprep.mubr.bf16.mxu0 0
        %620 = vmatmul.mubr.bf16.gmra.mxu0 %v397
        %v621 = vpop.f32.mrf.mxu0
        %v622 = vadd.f32 %v330, %v621
        %v623 = vpop.f32.mrf.mxu0
        %v624 = vpop.f32.mrf.mxu0
        %v625 = vadd.f32 %v330, %v624
        %v626 = vpop.f32.mrf.mxu0
        %627 = vmatprep.mubr.bf16.mxu0 0
        %628 = vmatmul.mubr.bf16.gmra.mxu0 %v400
        %v629 = vpop.f32.mrf.mxu0
        %v630 = vadd.f32 %v330, %v629
        %v631 = vpop.f32.mrf.mxu0
        %v632 = vpop.f32.mrf.mxu0
        %v633 = vadd.f32 %v330, %v632
        %v634 = vpop.f32.mrf.mxu0
        %635 = vmatprep.mubr.bf16.mxu0 0
        %636 = vmatmul.mubr.bf16.gmra.mxu0 %v403
        %v637 = vpop.f32.mrf.mxu0
        %v638 = vadd.f32 %v330, %v637
        %v639 = vpop.f32.mrf.mxu0
        %v640 = vpop.f32.mrf.mxu0
        %v641 = vadd.f32 %v330, %v640
        %v642 = vpop.f32.mrf.mxu0
        %643 = vmatprep.mubr.bf16.mxu0 0
        %644 = vmatmul.mubr.bf16.gmra.mxu0 %v406
        %v645 = vpop.f32.mrf.mxu0
        %v646 = vadd.f32 %v330, %v645
        %v647 = vpop.f32.mrf.mxu0
        %v648 = vpop.f32.mrf.mxu0
        %v649 = vadd.f32 %v330, %v648
        %v650 = vpop.f32.mrf.mxu0
        %651 = vmatprep.mubr.bf16.mxu0 0
        %652 = vmatmul.mubr.bf16.gmra.mxu0 %v409
        %v653 = vpop.f32.mrf.mxu0
        %v654 = vadd.f32 %v330, %v653
        %v655 = vpop.f32.mrf.mxu0
        %v656 = vpop.f32.mrf.mxu0
        %v657 = vadd.f32 %v330, %v656
        %v658 = vpop.f32.mrf.mxu0
        %659 = vmatprep.mubr.bf16.mxu0 0
        %660 = vmatmul.mubr.bf16.gmra.mxu0 %v412
        %v661 = vpop.f32.mrf.mxu0
        %v662 = vadd.f32 %v330, %v661
        %v663 = vpop.f32.mrf.mxu0
        %v664 = vpop.f32.mrf.mxu0
        %v665 = vadd.f32 %v330, %v664
        %v666 = vpop.f32.mrf.mxu0
        %667 = vmatprep.mubr.bf16.mxu0 0
        %668 = vmatmul.mubr.bf16.gmra.mxu0 %v415
        %v669 = vpop.f32.mrf.mxu0
        %v670 = vadd.f32 %v330, %v669
        %v671 = vpop.f32.mrf.mxu0
        %v672 = vpop.f32.mrf.mxu0
        %v673 = vadd.f32 %v330, %v672
        %v674 = vpop.f32.mrf.mxu0
        %675 = vmatprep.mubr.bf16.mxu0 0
        %676 = vmatmul.mubr.bf16.gmra.mxu0 %v418
        %v677 = vpop.f32.mrf.mxu0
        %v678 = vadd.f32 %v330, %v677
        %v679 = vpop.f32.mrf.mxu0
        %v680 = vpop.f32.mrf.mxu0
        %v681 = vadd.f32 %v330, %v680
        %v682 = vpop.f32.mrf.mxu0
        %683 = vmatprep.mubr.bf16.mxu0 0
        %684 = vmatmul.mubr.bf16.gmra.mxu0 %v421
        %v685 = vpop.f32.mrf.mxu0
        %v686 = vadd.f32 %v330, %v685
        %v687 = vpop.f32.mrf.mxu0
        %v688 = vpop.f32.mrf.mxu0
        %v689 = vadd.f32 %v330, %v688
        %v690 = vpop.f32.mrf.mxu0
        %691 = vmatprep.mubr.bf16.mxu0 0
        %692 = vmatmul.mubr.bf16.gmra.mxu0 %v424
        %v693 = vpop.f32.mrf.mxu0
        %v694 = vadd.f32 %v330, %v693
        %v695 = vpop.f32.mrf.mxu0
        %v696 = vpop.f32.mrf.mxu0
        %v697 = vadd.f32 %v330, %v696
        %v698 = vpop.f32.mrf.mxu0
        %699 = vmatprep.mubr.bf16.mxu0 0
        %700 = vmatmul.mubr.bf16.gmra.mxu0 %v427
        %v701 = vpop.f32.mrf.mxu0
        %v702 = vadd.f32 %v330, %v701
        %v703 = vpop.f32.mrf.mxu0
        %v704 = vpop.f32.mrf.mxu0
        %v705 = vadd.f32 %v330, %v704
        %v706 = vpop.f32.mrf.mxu0
        %707 = vmatprep.mubr.bf16.mxu0 0
        %708 = vmatmul.mubr.bf16.gmra.mxu0 %v430
        %v709 = vpop.f32.mrf.mxu0
        %v710 = vadd.f32 %v330, %v709
        %v711 = vpop.f32.mrf.mxu0
        %v712 = vpop.f32.mrf.mxu0
        %v713 = vadd.f32 %v330, %v712
        %v714 = vpop.f32.mrf.mxu0
        %715 = vmatprep.mubr.bf16.mxu0 0
        %716 = vmatmul.mubr.bf16.gmra.mxu0 %v433
        %v717 = vpop.f32.mrf.mxu0
        %v718 = vadd.f32 %v330, %v717
        %v719 = vpop.f32.mrf.mxu0
        %v720 = vpop.f32.mrf.mxu0
        %v721 = vadd.f32 %v330, %v720
        %v722 = vpop.f32.mrf.mxu0
        %723 = vdwg.mxu0
        %v724 = vxor.u32 %v470, 2147483648
        %v725 = vxor.u32 %v473, 2147483648
        %v726 = vxor.u32 %v478, 2147483648
        %v727 = vxor.u32 %v481, 2147483648
        %v728 = vxor.u32 %v486, 2147483648
        %v729 = vxor.u32 %v489, 2147483648
        %v730 = vxor.u32 %v494, 2147483648
        %v731 = vxor.u32 %v497, 2147483648
        %v732 = vxor.u32 %v502, 2147483648
        %v733 = vxor.u32 %v505, 2147483648
        %v734 = vxor.u32 %v510, 2147483648
        %v735 = vxor.u32 %v513, 2147483648
        %v736 = vxor.u32 %v518, 2147483648
        %v737 = vxor.u32 %v521, 2147483648
        %v738 = vxor.u32 %v526, 2147483648
        %v739 = vxor.u32 %v529, 2147483648
        %v740 = vxor.u32 %v534, 2147483648
        %v741 = vxor.u32 %v537, 2147483648
        %v742 = vxor.u32 %v542, 2147483648
        %v743 = vxor.u32 %v545, 2147483648
        %v744 = vxor.u32 %v550, 2147483648
        %v745 = vxor.u32 %v553, 2147483648
        %v746 = vxor.u32 %v558, 2147483648
        %v747 = vxor.u32 %v561, 2147483648
        %v748 = vxor.u32 %v566, 2147483648
        %v749 = vxor.u32 %v569, 2147483648
        %v750 = vxor.u32 %v574, 2147483648
        %v751 = vxor.u32 %v577, 2147483648
        %v752 = vxor.u32 %v582, 2147483648
        %v753 = vxor.u32 %v585, 2147483648
        %v754 = vxor.u32 %v590, 2147483648
        %v755 = vxor.u32 %v593, 2147483648
        %v756 = vxor.u32 %v598, 2147483648
        %v757 = vxor.u32 %v601, 2147483648
        %v758 = vxor.u32 %v606, 2147483648
        %v759 = vxor.u32 %v609, 2147483648
        %v760 = vxor.u32 %v614, 2147483648
        %v761 = vxor.u32 %v617, 2147483648
        %v762 = vxor.u32 %v622, 2147483648
        %v763 = vxor.u32 %v625, 2147483648
        %v764 = vxor.u32 %v630, 2147483648
        %v765 = vxor.u32 %v633, 2147483648
        %v766 = vxor.u32 %v638, 2147483648
        %v767 = vxor.u32 %v641, 2147483648
        %v768 = vxor.u32 %v646, 2147483648
        %v769 = vxor.u32 %v649, 2147483648
        %v770 = vxor.u32 %v654, 2147483648
        %v771 = vxor.u32 %v657, 2147483648
        %v772 = vxor.u32 %v662, 2147483648
        %v773 = vxor.u32 %v665, 2147483648
        %v774 = vxor.u32 %v670, 2147483648
        %v775 = vxor.u32 %v673, 2147483648
        %v776 = vxor.u32 %v678, 2147483648
        %v777 = vxor.u32 %v681, 2147483648
        %v778 = vxor.u32 %v686, 2147483648
        %v779 = vxor.u32 %v689, 2147483648
        %v780 = vxor.u32 %v694, 2147483648
        %v781 = vxor.u32 %v697, 2147483648
        %v782 = vxor.u32 %v702, 2147483648
        %v783 = vxor.u32 %v705, 2147483648
        %v784 = vxor.u32 %v710, 2147483648
        %v785 = vxor.u32 %v713, 2147483648
        %v786 = vxor.u32 %v718, 2147483648
        %v787 = vxor.u32 %v721, 2147483648
        %v788 = vmul.f32 %v724, 1.442695
        %v789 = vpow.pop %v788
        %v790 = vmul.f32 %v725, 1.442695
        %v791 = vpow.pop %v790
        %v792 = vmul.f32 %v726, 1.442695
        %v793 = vpow.pop %v792
        %v794 = vmul.f32 %v727, 1.442695
        %v795 = vpow.pop %v794
        %v796 = vmul.f32 %v728, 1.442695
        %v797 = vpow.pop %v796
        %v798 = vmul.f32 %v729, 1.442695
        %v799 = vpow.pop %v798
        %v800 = vmul.f32 %v730, 1.442695
        %v801 = vpow.pop %v800
        %v802 = vmul.f32 %v731, 1.442695
        %v803 = vpow.pop %v802
        %v804 = vmul.f32 %v732, 1.442695
        %v805 = vpow.pop %v804
        %v806 = vmul.f32 %v733, 1.442695
        %v807 = vpow.pop %v806
        %v808 = vmul.f32 %v734, 1.442695
        %v809 = vpow.pop %v808
        %v810 = vmul.f32 %v735, 1.442695
        %v811 = vpow.pop %v810
        %v812 = vmul.f32 %v736, 1.442695
        %v813 = vpow.pop %v812
        %v814 = vmul.f32 %v737, 1.442695
        %v815 = vpow.pop %v814
        %v816 = vmul.f32 %v738, 1.442695
        %v817 = vpow.pop %v816
        %v818 = vmul.f32 %v739, 1.442695
        %v819 = vpow.pop %v818
        %v820 = vmul.f32 %v740, 1.442695
        %v821 = vpow.pop %v820
        %v822 = vmul.f32 %v741, 1.442695
        %v823 = vpow.pop %v822
        %v824 = vmul.f32 %v742, 1.442695
        %v825 = vpow.pop %v824
        %v826 = vmul.f32 %v743, 1.442695
        %v827 = vpow.pop %v826
        %v828 = vmul.f32 %v744, 1.442695
        %v829 = vpow.pop %v828
        %v830 = vmul.f32 %v745, 1.442695
        %v831 = vpow.pop %v830
        %v832 = vmul.f32 %v746, 1.442695
        %v833 = vpow.pop %v832
        %v834 = vmul.f32 %v747, 1.442695
        %v835 = vpow.pop %v834
        %v836 = vmul.f32 %v748, 1.442695
        %v837 = vpow.pop %v836
        %v838 = vmul.f32 %v749, 1.442695
        %v839 = vpow.pop %v838
        %v840 = vmul.f32 %v750, 1.442695
        %v841 = vpow.pop %v840
        %v842 = vmul.f32 %v751, 1.442695
        %v843 = vpow.pop %v842
        %v844 = vmul.f32 %v752, 1.442695
        %v845 = vpow.pop %v844
        %v846 = vmul.f32 %v753, 1.442695
        %v847 = vpow.pop %v846
        %v848 = vmul.f32 %v754, 1.442695
        %v849 = vpow.pop %v848
        %v850 = vmul.f32 %v755, 1.442695
        %v851 = vpow.pop %v850
        %v852 = vmul.f32 %v756, 1.442695
        %v853 = vpow.pop %v852
        %v854 = vmul.f32 %v757, 1.442695
        %v855 = vpow.pop %v854
        %v856 = vmul.f32 %v758, 1.442695
        %v857 = vpow.pop %v856
        %v858 = vmul.f32 %v759, 1.442695
        %v859 = vpow.pop %v858
        %v860 = vmul.f32 %v760, 1.442695
        %v861 = vpow.pop %v860
        %v862 = vmul.f32 %v761, 1.442695
        %v863 = vpow.pop %v862
        %v864 = vmul.f32 %v762, 1.442695
        %v865 = vpow.pop %v864
        %v866 = vmul.f32 %v763, 1.442695
        %v867 = vpow.pop %v866
        %v868 = vmul.f32 %v764, 1.442695
        %v869 = vpow.pop %v868
        %v870 = vmul.f32 %v765, 1.442695
        %v871 = vpow.pop %v870
        %v872 = vmul.f32 %v766, 1.442695
        %v873 = vpow.pop %v872
        %v874 = vmul.f32 %v767, 1.442695
        %v875 = vpow.pop %v874
        %v876 = vmul.f32 %v768, 1.442695
        %v877 = vpow.pop %v876
        %v878 = vmul.f32 %v769, 1.442695
        %v879 = vpow.pop %v878
        %v880 = vmul.f32 %v770, 1.442695
        %v881 = vpow.pop %v880
        %v882 = vmul.f32 %v771, 1.442695
        %v883 = vpow.pop %v882
        %v884 = vmul.f32 %v772, 1.442695
        %v885 = vpow.pop %v884
        %v886 = vmul.f32 %v773, 1.442695
        %v887 = vpow.pop %v886
        %v888 = vmul.f32 %v774, 1.442695
        %v889 = vpow.pop %v888
        %v890 = vmul.f32 %v775, 1.442695
        %v891 = vpow.pop %v890
        %v892 = vmul.f32 %v776, 1.442695
        %v893 = vpow.pop %v892
        %v894 = vmul.f32 %v777, 1.442695
        %v895 = vpow.pop %v894
        %v896 = vmul.f32 %v778, 1.442695
        %v897 = vpow.pop %v896
        %v898 = vmul.f32 %v779, 1.442695
        %v899 = vpow.pop %v898
        %v900 = vmul.f32 %v780, 1.442695
        %v901 = vpow.pop %v900
        %v902 = vmul.f32 %v781, 1.442695
        %v903 = vpow.pop %v902
        %v904 = vmul.f32 %v782, 1.442695
        %v905 = vpow.pop %v904
        %v906 = vmul.f32 %v783, 1.442695
        %v907 = vpow.pop %v906
        %v908 = vmul.f32 %v784, 1.442695
        %v909 = vpow.pop %v908
        %v910 = vmul.f32 %v785, 1.442695
        %v911 = vpow.pop %v910
        %v912 = vmul.f32 %v786, 1.442695
        %v913 = vpow.pop %v912
        %v914 = vmul.f32 %v787, 1.442695
        %v915 = vpow.pop %v914
        %v916 = vadd.f32 %v789, 1.0
        %v917 = vadd.f32 %v791, 1.0
        %v918 = vadd.f32 %v793, 1.0
        %v919 = vadd.f32 %v795, 1.0
        %v920 = vadd.f32 %v797, 1.0
        %v921 = vadd.f32 %v799, 1.0
        %v922 = vadd.f32 %v801, 1.0
        %v923 = vadd.f32 %v803, 1.0
        %v924 = vadd.f32 %v805, 1.0
        %v925 = vadd.f32 %v807, 1.0
        %v926 = vadd.f32 %v809, 1.0
        %v927 = vadd.f32 %v811, 1.0
        %v928 = vadd.f32 %v813, 1.0
        %v929 = vadd.f32 %v815, 1.0
        %v930 = vadd.f32 %v817, 1.0
        %v931 = vadd.f32 %v819, 1.0
        %v932 = vadd.f32 %v821, 1.0
        %v933 = vadd.f32 %v823, 1.0
        %v934 = vadd.f32 %v825, 1.0
        %v935 = vadd.f32 %v827, 1.0
        %v936 = vadd.f32 %v829, 1.0
        %v937 = vadd.f32 %v831, 1.0
        %v938 = vadd.f32 %v833, 1.0
        %v939 = vadd.f32 %v835, 1.0
        %v940 = vadd.f32 %v837, 1.0
        %v941 = vadd.f32 %v839, 1.0
        %v942 = vadd.f32 %v841, 1.0
        %v943 = vadd.f32 %v843, 1.0
        %v944 = vadd.f32 %v845, 1.0
        %v945 = vadd.f32 %v847, 1.0
        %v946 = vadd.f32 %v849, 1.0
        %v947 = vadd.f32 %v851, 1.0
        %v948 = vadd.f32 %v853, 1.0
        %v949 = vadd.f32 %v855, 1.0
        %v950 = vadd.f32 %v857, 1.0
        %v951 = vadd.f32 %v859, 1.0
        %v952 = vadd.f32 %v861, 1.0
        %v953 = vadd.f32 %v863, 1.0
        %v954 = vadd.f32 %v865, 1.0
        %v955 = vadd.f32 %v867, 1.0
        %v956 = vadd.f32 %v869, 1.0
        %v957 = vadd.f32 %v871, 1.0
        %v958 = vadd.f32 %v873, 1.0
        %v959 = vadd.f32 %v875, 1.0
        %v960 = vadd.f32 %v877, 1.0
        %v961 = vadd.f32 %v879, 1.0
        %v962 = vadd.f32 %v881, 1.0
        %v963 = vadd.f32 %v883, 1.0
        %v964 = vadd.f32 %v885, 1.0
        %v965 = vadd.f32 %v887, 1.0
        %v966 = vadd.f32 %v889, 1.0
        %v967 = vadd.f32 %v891, 1.0
        %v968 = vadd.f32 %v893, 1.0
        %v969 = vadd.f32 %v895, 1.0
        %v970 = vadd.f32 %v897, 1.0
        %v971 = vadd.f32 %v899, 1.0
        %v972 = vadd.f32 %v901, 1.0
        %v973 = vadd.f32 %v903, 1.0
        %v974 = vadd.f32 %v905, 1.0
        %v975 = vadd.f32 %v907, 1.0
        %v976 = vadd.f32 %v909, 1.0
        %v977 = vadd.f32 %v911, 1.0
        %v978 = vadd.f32 %v913, 1.0
        %v979 = vadd.f32 %v915, 1.0
        %v980 = vrcp.pop %v916
        %v981 = vmul.f32 1.0, %v980
        %v982 = vrcp.pop %v917
        %v983 = vmul.f32 1.0, %v982
        %v984 = vrcp.pop %v918
        %v985 = vmul.f32 1.0, %v984
        %v986 = vrcp.pop %v919
        %v987 = vmul.f32 1.0, %v986
        %v988 = vrcp.pop %v920
        %v989 = vmul.f32 1.0, %v988
        %v990 = vrcp.pop %v921
        %v991 = vmul.f32 1.0, %v990
        %v992 = vrcp.pop %v922
        %v993 = vmul.f32 1.0, %v992
        %v994 = vrcp.pop %v923
        %v995 = vmul.f32 1.0, %v994
        %v996 = vrcp.pop %v924
        %v997 = vmul.f32 1.0, %v996
        %v998 = vrcp.pop %v925
        %v999 = vmul.f32 1.0, %v998
        %v1000 = vrcp.pop %v926
        %v1001 = vmul.f32 1.0, %v1000
        %v1002 = vrcp.pop %v927
        %v1003 = vmul.f32 1.0, %v1002
        %v1004 = vrcp.pop %v928
        %v1005 = vmul.f32 1.0, %v1004
        %v1006 = vrcp.pop %v929
        %v1007 = vmul.f32 1.0, %v1006
        %v1008 = vrcp.pop %v930
        %v1009 = vmul.f32 1.0, %v1008
        %v1010 = vrcp.pop %v931
        %v1011 = vmul.f32 1.0, %v1010
        %v1012 = vrcp.pop %v932
        %v1013 = vmul.f32 1.0, %v1012
        %v1014 = vrcp.pop %v933
        %v1015 = vmul.f32 1.0, %v1014
        %v1016 = vrcp.pop %v934
        %v1017 = vmul.f32 1.0, %v1016
        %v1018 = vrcp.pop %v935
        %v1019 = vmul.f32 1.0, %v1018
        %v1020 = vrcp.pop %v936
        %v1021 = vmul.f32 1.0, %v1020
        %v1022 = vrcp.pop %v937
        %v1023 = vmul.f32 1.0, %v1022
        %v1024 = vrcp.pop %v938
        %v1025 = vmul.f32 1.0, %v1024
        %v1026 = vrcp.pop %v939
        %v1027 = vmul.f32 1.0, %v1026
        %v1028 = vrcp.pop %v940
        %v1029 = vmul.f32 1.0, %v1028
        %v1030 = vrcp.pop %v941
        %v1031 = vmul.f32 1.0, %v1030
        %v1032 = vrcp.pop %v942
        %v1033 = vmul.f32 1.0, %v1032
        %v1034 = vrcp.pop %v943
        %v1035 = vmul.f32 1.0, %v1034
        %v1036 = vrcp.pop %v944
        %v1037 = vmul.f32 1.0, %v1036
        %v1038 = vrcp.pop %v945
        %v1039 = vmul.f32 1.0, %v1038
        %v1040 = vrcp.pop %v946
        %v1041 = vmul.f32 1.0, %v1040
        %v1042 = vrcp.pop %v947
        %v1043 = vmul.f32 1.0, %v1042
        %v1044 = vrcp.pop %v948
        %v1045 = vmul.f32 1.0, %v1044
        %v1046 = vrcp.pop %v949
        %v1047 = vmul.f32 1.0, %v1046
        %v1048 = vrcp.pop %v950
        %v1049 = vmul.f32 1.0, %v1048
        %v1050 = vrcp.pop %v951
        %v1051 = vmul.f32 1.0, %v1050
        %v1052 = vrcp.pop %v952
        %v1053 = vmul.f32 1.0, %v1052
        %v1054 = vrcp.pop %v953
        %v1055 = vmul.f32 1.0, %v1054
        %v1056 = vrcp.pop %v954
        %v1057 = vmul.f32 1.0, %v1056
        %v1058 = vrcp.pop %v955
        %v1059 = vmul.f32 1.0, %v1058
        %v1060 = vrcp.pop %v956
        %v1061 = vmul.f32 1.0, %v1060
        %v1062 = vrcp.pop %v957
        %v1063 = vmul.f32 1.0, %v1062
        %v1064 = vrcp.pop %v958
        %v1065 = vmul.f32 1.0, %v1064
        %v1066 = vrcp.pop %v959
        %v1067 = vmul.f32 1.0, %v1066
        %v1068 = vrcp.pop %v960
        %v1069 = vmul.f32 1.0, %v1068
        %v1070 = vrcp.pop %v961
        %v1071 = vmul.f32 1.0, %v1070
        %v1072 = vrcp.pop %v962
        %v1073 = vmul.f32 1.0, %v1072
        %v1074 = vrcp.pop %v963
        %v1075 = vmul.f32 1.0, %v1074
        %v1076 = vrcp.pop %v964
        %v1077 = vmul.f32 1.0, %v1076
        %v1078 = vrcp.pop %v965
        %v1079 = vmul.f32 1.0, %v1078
        %v1080 = vrcp.pop %v966
        %v1081 = vmul.f32 1.0, %v1080
        %v1082 = vrcp.pop %v967
        %v1083 = vmul.f32 1.0, %v1082
        %v1084 = vrcp.pop %v968
        %v1085 = vmul.f32 1.0, %v1084
        %v1086 = vrcp.pop %v969
        %v1087 = vmul.f32 1.0, %v1086
        %v1088 = vrcp.pop %v970
        %v1089 = vmul.f32 1.0, %v1088
        %v1090 = vrcp.pop %v971
        %v1091 = vmul.f32 1.0, %v1090
        %v1092 = vrcp.pop %v972
        %v1093 = vmul.f32 1.0, %v1092
        %v1094 = vrcp.pop %v973
        %v1095 = vmul.f32 1.0, %v1094
        %v1096 = vrcp.pop %v974
        %v1097 = vmul.f32 1.0, %v1096
        %v1098 = vrcp.pop %v975
        %v1099 = vmul.f32 1.0, %v1098
        %v1100 = vrcp.pop %v976
        %v1101 = vmul.f32 1.0, %v1100
        %v1102 = vrcp.pop %v977
        %v1103 = vmul.f32 1.0, %v1102
        %v1104 = vrcp.pop %v978
        %v1105 = vmul.f32 1.0, %v1104
        %v1106 = vrcp.pop %v979
        %v1107 = vmul.f32 1.0, %v1106
        %v1108 = vpack.c.bf16 %v983, %v981
        %v1109 = vpack.c.bf16 %v987, %v985
        %v1110 = vpack.c.bf16 %v991, %v989
        %v1111 = vpack.c.bf16 %v995, %v993
        %v1112 = vpack.c.bf16 %v999, %v997
        %v1113 = vpack.c.bf16 %v1003, %v1001
        %v1114 = vpack.c.bf16 %v1007, %v1005
        %v1115 = vpack.c.bf16 %v1011, %v1009
        %v1116 = vpack.c.bf16 %v1015, %v1013
        %v1117 = vpack.c.bf16 %v1019, %v1017
        %v1118 = vpack.c.bf16 %v1023, %v1021
        %v1119 = vpack.c.bf16 %v1027, %v1025
        %v1120 = vpack.c.bf16 %v1031, %v1029
        %v1121 = vpack.c.bf16 %v1035, %v1033
        %v1122 = vpack.c.bf16 %v1039, %v1037
        %v1123 = vpack.c.bf16 %v1043, %v1041
        %v1124 = vpack.c.bf16 %v1047, %v1045
        %v1125 = vpack.c.bf16 %v1051, %v1049
        %v1126 = vpack.c.bf16 %v1055, %v1053
        %v1127 = vpack.c.bf16 %v1059, %v1057
        %v1128 = vpack.c.bf16 %v1063, %v1061
        %v1129 = vpack.c.bf16 %v1067, %v1065
        %v1130 = vpack.c.bf16 %v1071, %v1069
        %v1131 = vpack.c.bf16 %v1075, %v1073
        %v1132 = vpack.c.bf16 %v1079, %v1077
        %v1133 = vpack.c.bf16 %v1083, %v1081
        %v1134 = vpack.c.bf16 %v1087, %v1085
        %v1135 = vpack.c.bf16 %v1091, %v1089
        %v1136 = vpack.c.bf16 %v1095, %v1093
        %v1137 = vpack.c.bf16 %v1099, %v1097
        %v1138 = vpack.c.bf16 %v1103, %v1101
        %v1139 = vpack.c.bf16 %v1107, %v1105
        %v1140 = vld [vmem:[%s3] sm:$0xf]
        %v1141 = vld [vmem:[%s3 + $0x4] sm:$0xf]
        %v1142 = vld [vmem:[%s3 + $0x8] sm:$0xf]
        %v1143 = vld [vmem:[%s3 + $0xc] sm:$0xf]
        %v1144 = vld [vmem:[%s3 + $0x10] sm:$0xf]
        %v1145 = vld [vmem:[%s3 + $0x14] sm:$0xf]
        %v1146 = vld [vmem:[%s3 + $0x18] sm:$0xf]
        %v1147 = vld [vmem:[%s3 + $0x1c] sm:$0xf]
        %v1148 = vld [vmem:[%s3 + $0x20] sm:$0xf]
        %v1149 = vld [vmem:[%s3 + $0x24] sm:$0xf]
        %v1150 = vld [vmem:[%s3 + $0x28] sm:$0xf]
        %v1151 = vld [vmem:[%s3 + $0x2c] sm:$0xf]
        %v1152 = vld [vmem:[%s3 + $0x30] sm:$0xf]
        %v1153 = vld [vmem:[%s3 + $0x34] sm:$0xf]
        %v1154 = vld [vmem:[%s3 + $0x38] sm:$0xf]
        %v1155 = vld [vmem:[%s3 + $0x3c] sm:$0xf]
        %v1156 = vld [vmem:[%s4] sm:$0x1]
        %v1158 = vlaneseq
        %v1159 = vshrl.u32 %v1158, 7
        %v1160 = vsub.s32 0, %v1159
        %v1161 = vrot.slane %v1156, %v1160
        %v1179 = vunpack.c.l.b16 %v1140
        %v1180 = vunpack.c.l.b16 %v1141
        %v1181 = vunpack.c.l.b16 %v1142
        %v1182 = vunpack.c.l.b16 %v1143
        %v1183 = vunpack.c.l.b16 %v1144
        %v1184 = vunpack.c.l.b16 %v1145
        %v1185 = vunpack.c.l.b16 %v1146
        %v1186 = vunpack.c.l.b16 %v1147
        %v1187 = vunpack.c.l.b16 %v1148
        %v1188 = vunpack.c.l.b16 %v1149
        %v1189 = vunpack.c.l.b16 %v1150
        %v1190 = vunpack.c.l.b16 %v1151
        %v1191 = vunpack.c.l.b16 %v1152
        %v1192 = vunpack.c.l.b16 %v1153
        %v1193 = vunpack.c.l.b16 %v1154
        %v1194 = vunpack.c.l.b16 %v1155
        %v1195 = vpack.c.b16 %v1180, %v1179
        %v1196 = vpack.c.b16 %v1182, %v1181
        %v1197 = vpack.c.b16 %v1184, %v1183
        %v1198 = vpack.c.b16 %v1186, %v1185
        %v1199 = vpack.c.b16 %v1188, %v1187
        %v1200 = vpack.c.b16 %v1190, %v1189
        %v1201 = vpack.c.b16 %v1192, %v1191
        %v1202 = vpack.c.b16 %v1194, %v1193
        %1211 = vmatprep.subr.bf16.mxu0 0
        %1212 = vmatpush1.bf16.msra.mxu0 %v1202
        %1213 = vmatprep.subr.bf16.mxu0 0
        %1214 = vmatpush1.bf16.msra.mxu0 %v1201
        %1215 = vmatprep.subr.bf16.mxu0 0
        %1216 = vmatpush1.bf16.msra.mxu0 %v1200
        %1217 = vmatprep.subr.bf16.mxu0 0
        %1218 = vmatpush1.bf16.msra.mxu0 %v1199
        %1219 = vmatprep.subr.bf16.mxu0 0
        %1220 = vmatpush1.bf16.msra.mxu0 %v1198
        %1221 = vmatprep.subr.bf16.mxu0 0
        %1222 = vmatpush1.bf16.msra.mxu0 %v1197
        %1223 = vmatprep.subr.bf16.mxu0 0
        %1224 = vmatpush1.bf16.msra.mxu0 %v1196
        %1225 = vmatprep.subr.bf16.mxu0 0
        %1226 = vmatpush1.bf16.msra.mxu0 %v1195
        %1227 = vmatprep.subr.bf16.mxu0 0
        %1228 = vmatpush2.bf16.msra.mxu0 0
        %1229 = vmatprep.subr.bf16.mxu0 0
        %1230 = vmatpush2.bf16.msra.mxu0 0
        %1231 = vmatprep.subr.bf16.mxu0 0
        %1232 = vmatpush2.bf16.msra.mxu0 0
        %1233 = vmatprep.subr.bf16.mxu0 0
        %1234 = vmatpush2.bf16.msra.mxu0 0
        %1235 = vmatprep.subr.bf16.mxu0 0
        %1236 = vmatpush2.bf16.msra.mxu0 0
        %1237 = vmatprep.subr.bf16.mxu0 0
        %1238 = vmatpush2.bf16.msra.mxu0 0
        %1239 = vmatprep.subr.bf16.mxu0 0
        %1240 = vmatpush2.bf16.msra.mxu0 0
        %1241 = vmatprep.subr.bf16.mxu0 0
        %1242 = vmatpush2.bf16.msra.mxu0 0
        %1243 = vmatprep.mubr.bf16.mxu0 0
        %1244 = vmatmul.mubr.bf16.gmra.mxu0 %v1108
        %v1245 = vpop.f32.mrf.mxu0
        %v1246 = vadd.f32 %v1161, %v1245
        %v1247 = vpop.f32.mrf.mxu0
        %v1248 = vpop.f32.mrf.mxu0
        %v1249 = vadd.f32 %v1161, %v1248
        %v1250 = vpop.f32.mrf.mxu0
        %1251 = vmatprep.mubr.bf16.mxu0 0
        %1252 = vmatmul.mubr.bf16.gmra.mxu0 %v1109
        %v1253 = vpop.f32.mrf.mxu0
        %v1254 = vadd.f32 %v1161, %v1253
        %v1255 = vpop.f32.mrf.mxu0
        %v1256 = vpop.f32.mrf.mxu0
        %v1257 = vadd.f32 %v1161, %v1256
        %v1258 = vpop.f32.mrf.mxu0
        %1259 = vmatprep.mubr.bf16.mxu0 0
        %1260 = vmatmul.mubr.bf16.gmra.mxu0 %v1110
        %v1261 = vpop.f32.mrf.mxu0
        %v1262 = vadd.f32 %v1161, %v1261
        %v1263 = vpop.f32.mrf.mxu0
        %v1264 = vpop.f32.mrf.mxu0
        %v1265 = vadd.f32 %v1161, %v1264
        %v1266 = vpop.f32.mrf.mxu0
        %1267 = vmatprep.mubr.bf16.mxu0 0
        %1268 = vmatmul.mubr.bf16.gmra.mxu0 %v1111
        %v1269 = vpop.f32.mrf.mxu0
        %v1270 = vadd.f32 %v1161, %v1269
        %v1271 = vpop.f32.mrf.mxu0
        %v1272 = vpop.f32.mrf.mxu0
        %v1273 = vadd.f32 %v1161, %v1272
        %v1274 = vpop.f32.mrf.mxu0
        %1275 = vmatprep.mubr.bf16.mxu0 0
        %1276 = vmatmul.mubr.bf16.gmra.mxu0 %v1112
        %v1277 = vpop.f32.mrf.mxu0
        %v1278 = vadd.f32 %v1161, %v1277
        %v1279 = vpop.f32.mrf.mxu0
        %v1280 = vpop.f32.mrf.mxu0
        %v1281 = vadd.f32 %v1161, %v1280
        %v1282 = vpop.f32.mrf.mxu0
        %1283 = vmatprep.mubr.bf16.mxu0 0
        %1284 = vmatmul.mubr.bf16.gmra.mxu0 %v1113
        %v1285 = vpop.f32.mrf.mxu0
        %v1286 = vadd.f32 %v1161, %v1285
        %v1287 = vpop.f32.mrf.mxu0
        %v1288 = vpop.f32.mrf.mxu0
        %v1289 = vadd.f32 %v1161, %v1288
        %v1290 = vpop.f32.mrf.mxu0
        %1291 = vmatprep.mubr.bf16.mxu0 0
        %1292 = vmatmul.mubr.bf16.gmra.mxu0 %v1114
        %v1293 = vpop.f32.mrf.mxu0
        %v1294 = vadd.f32 %v1161, %v1293
        %v1295 = vpop.f32.mrf.mxu0
        %v1296 = vpop.f32.mrf.mxu0
        %v1297 = vadd.f32 %v1161, %v1296
        %v1298 = vpop.f32.mrf.mxu0
        %1299 = vmatprep.mubr.bf16.mxu0 0
        %1300 = vmatmul.mubr.bf16.gmra.mxu0 %v1115
        %v1301 = vpop.f32.mrf.mxu0
        %v1302 = vadd.f32 %v1161, %v1301
        %v1303 = vpop.f32.mrf.mxu0
        %v1304 = vpop.f32.mrf.mxu0
        %v1305 = vadd.f32 %v1161, %v1304
        %v1306 = vpop.f32.mrf.mxu0
        %1307 = vmatprep.mubr.bf16.mxu0 0
        %1308 = vmatmul.mubr.bf16.gmra.mxu0 %v1116
        %v1309 = vpop.f32.mrf.mxu0
        %v1310 = vadd.f32 %v1161, %v1309
        %v1311 = vpop.f32.mrf.mxu0
        %v1312 = vpop.f32.mrf.mxu0
        %v1313 = vadd.f32 %v1161, %v1312
        %v1314 = vpop.f32.mrf.mxu0
        %1315 = vmatprep.mubr.bf16.mxu0 0
        %1316 = vmatmul.mubr.bf16.gmra.mxu0 %v1117
        %v1317 = vpop.f32.mrf.mxu0
        %v1318 = vadd.f32 %v1161, %v1317
        %v1319 = vpop.f32.mrf.mxu0
        %v1320 = vpop.f32.mrf.mxu0
        %v1321 = vadd.f32 %v1161, %v1320
        %v1322 = vpop.f32.mrf.mxu0
        %1323 = vmatprep.mubr.bf16.mxu0 0
        %1324 = vmatmul.mubr.bf16.gmra.mxu0 %v1118
        %v1325 = vpop.f32.mrf.mxu0
        %v1326 = vadd.f32 %v1161, %v1325
        %v1327 = vpop.f32.mrf.mxu0
        %v1328 = vpop.f32.mrf.mxu0
        %v1329 = vadd.f32 %v1161, %v1328
        %v1330 = vpop.f32.mrf.mxu0
        %1331 = vmatprep.mubr.bf16.mxu0 0
        %1332 = vmatmul.mubr.bf16.gmra.mxu0 %v1119
        %v1333 = vpop.f32.mrf.mxu0
        %v1334 = vadd.f32 %v1161, %v1333
        %v1335 = vpop.f32.mrf.mxu0
        %v1336 = vpop.f32.mrf.mxu0
        %v1337 = vadd.f32 %v1161, %v1336
        %v1338 = vpop.f32.mrf.mxu0
        %1339 = vmatprep.mubr.bf16.mxu0 0
        %1340 = vmatmul.mubr.bf16.gmra.mxu0 %v1120
        %v1341 = vpop.f32.mrf.mxu0
        %v1342 = vadd.f32 %v1161, %v1341
        %v1343 = vpop.f32.mrf.mxu0
        %v1344 = vpop.f32.mrf.mxu0
        %v1345 = vadd.f32 %v1161, %v1344
        %v1346 = vpop.f32.mrf.mxu0
        %1347 = vmatprep.mubr.bf16.mxu0 0
        %1348 = vmatmul.mubr.bf16.gmra.mxu0 %v1121
        %v1349 = vpop.f32.mrf.mxu0
        %v1350 = vadd.f32 %v1161, %v1349
        %v1351 = vpop.f32.mrf.mxu0
        %v1352 = vpop.f32.mrf.mxu0
        %v1353 = vadd.f32 %v1161, %v1352
        %v1354 = vpop.f32.mrf.mxu0
        %1355 = vmatprep.mubr.bf16.mxu0 0
        %1356 = vmatmul.mubr.bf16.gmra.mxu0 %v1122
        %v1357 = vpop.f32.mrf.mxu0
        %v1358 = vadd.f32 %v1161, %v1357
        %v1359 = vpop.f32.mrf.mxu0
        %v1360 = vpop.f32.mrf.mxu0
        %v1361 = vadd.f32 %v1161, %v1360
        %v1362 = vpop.f32.mrf.mxu0
        %1363 = vmatprep.mubr.bf16.mxu0 0
        %1364 = vmatmul.mubr.bf16.gmra.mxu0 %v1123
        %v1365 = vpop.f32.mrf.mxu0
        %v1366 = vadd.f32 %v1161, %v1365
        %v1367 = vpop.f32.mrf.mxu0
        %v1368 = vpop.f32.mrf.mxu0
        %v1369 = vadd.f32 %v1161, %v1368
        %v1370 = vpop.f32.mrf.mxu0
        %1371 = vmatprep.mubr.bf16.mxu0 0
        %1372 = vmatmul.mubr.bf16.gmra.mxu0 %v1124
        %v1373 = vpop.f32.mrf.mxu0
        %v1374 = vadd.f32 %v1161, %v1373
        %v1375 = vpop.f32.mrf.mxu0
        %v1376 = vpop.f32.mrf.mxu0
        %v1377 = vadd.f32 %v1161, %v1376
        %v1378 = vpop.f32.mrf.mxu0
        %1379 = vmatprep.mubr.bf16.mxu0 0
        %1380 = vmatmul.mubr.bf16.gmra.mxu0 %v1125
        %v1381 = vpop.f32.mrf.mxu0
        %v1382 = vadd.f32 %v1161, %v1381
        %v1383 = vpop.f32.mrf.mxu0
        %v1384 = vpop.f32.mrf.mxu0
        %v1385 = vadd.f32 %v1161, %v1384
        %v1386 = vpop.f32.mrf.mxu0
        %1387 = vmatprep.mubr.bf16.mxu0 0
        %1388 = vmatmul.mubr.bf16.gmra.mxu0 %v1126
        %v1389 = vpop.f32.mrf.mxu0
        %v1390 = vadd.f32 %v1161, %v1389
        %v1391 = vpop.f32.mrf.mxu0
        %v1392 = vpop.f32.mrf.mxu0
        %v1393 = vadd.f32 %v1161, %v1392
        %v1394 = vpop.f32.mrf.mxu0
        %1395 = vmatprep.mubr.bf16.mxu0 0
        %1396 = vmatmul.mubr.bf16.gmra.mxu0 %v1127
        %v1397 = vpop.f32.mrf.mxu0
        %v1398 = vadd.f32 %v1161, %v1397
        %v1399 = vpop.f32.mrf.mxu0
        %v1400 = vpop.f32.mrf.mxu0
        %v1401 = vadd.f32 %v1161, %v1400
        %v1402 = vpop.f32.mrf.mxu0
        %1403 = vmatprep.mubr.bf16.mxu0 0
        %1404 = vmatmul.mubr.bf16.gmra.mxu0 %v1128
        %v1405 = vpop.f32.mrf.mxu0
        %v1406 = vadd.f32 %v1161, %v1405
        %v1407 = vpop.f32.mrf.mxu0
        %v1408 = vpop.f32.mrf.mxu0
        %v1409 = vadd.f32 %v1161, %v1408
        %v1410 = vpop.f32.mrf.mxu0
        %1411 = vmatprep.mubr.bf16.mxu0 0
        %1412 = vmatmul.mubr.bf16.gmra.mxu0 %v1129
        %v1413 = vpop.f32.mrf.mxu0
        %v1414 = vadd.f32 %v1161, %v1413
        %v1415 = vpop.f32.mrf.mxu0
        %v1416 = vpop.f32.mrf.mxu0
        %v1417 = vadd.f32 %v1161, %v1416
        %v1418 = vpop.f32.mrf.mxu0
        %1419 = vmatprep.mubr.bf16.mxu0 0
        %1420 = vmatmul.mubr.bf16.gmra.mxu0 %v1130
        %v1421 = vpop.f32.mrf.mxu0
        %v1422 = vadd.f32 %v1161, %v1421
        %v1423 = vpop.f32.mrf.mxu0
        %v1424 = vpop.f32.mrf.mxu0
        %v1425 = vadd.f32 %v1161, %v1424
        %v1426 = vpop.f32.mrf.mxu0
        %1427 = vmatprep.mubr.bf16.mxu0 0
        %1428 = vmatmul.mubr.bf16.gmra.mxu0 %v1131
        %v1429 = vpop.f32.mrf.mxu0
        %v1430 = vadd.f32 %v1161, %v1429
        %v1431 = vpop.f32.mrf.mxu0
        %v1432 = vpop.f32.mrf.mxu0
        %v1433 = vadd.f32 %v1161, %v1432
        %v1434 = vpop.f32.mrf.mxu0
        %1435 = vmatprep.mubr.bf16.mxu0 0
        %1436 = vmatmul.mubr.bf16.gmra.mxu0 %v1132
        %v1437 = vpop.f32.mrf.mxu0
        %v1438 = vadd.f32 %v1161, %v1437
        %v1439 = vpop.f32.mrf.mxu0
        %v1440 = vpop.f32.mrf.mxu0
        %v1441 = vadd.f32 %v1161, %v1440
        %v1442 = vpop.f32.mrf.mxu0
        %1443 = vmatprep.mubr.bf16.mxu0 0
        %1444 = vmatmul.mubr.bf16.gmra.mxu0 %v1133
        %v1445 = vpop.f32.mrf.mxu0
        %v1446 = vadd.f32 %v1161, %v1445
        %v1447 = vpop.f32.mrf.mxu0
        %v1448 = vpop.f32.mrf.mxu0
        %v1449 = vadd.f32 %v1161, %v1448
        %v1450 = vpop.f32.mrf.mxu0
        %1451 = vmatprep.mubr.bf16.mxu0 0
        %1452 = vmatmul.mubr.bf16.gmra.mxu0 %v1134
        %v1453 = vpop.f32.mrf.mxu0
        %v1454 = vadd.f32 %v1161, %v1453
        %v1455 = vpop.f32.mrf.mxu0
        %v1456 = vpop.f32.mrf.mxu0
        %v1457 = vadd.f32 %v1161, %v1456
        %v1458 = vpop.f32.mrf.mxu0
        %1459 = vmatprep.mubr.bf16.mxu0 0
        %1460 = vmatmul.mubr.bf16.gmra.mxu0 %v1135
        %v1461 = vpop.f32.mrf.mxu0
        %v1462 = vadd.f32 %v1161, %v1461
        %v1463 = vpop.f32.mrf.mxu0
        %v1464 = vpop.f32.mrf.mxu0
        %v1465 = vadd.f32 %v1161, %v1464
        %v1466 = vpop.f32.mrf.mxu0
        %1467 = vmatprep.mubr.bf16.mxu0 0
        %1468 = vmatmul.mubr.bf16.gmra.mxu0 %v1136
        %v1469 = vpop.f32.mrf.mxu0
        %v1470 = vadd.f32 %v1161, %v1469
        %v1471 = vpop.f32.mrf.mxu0
        %v1472 = vpop.f32.mrf.mxu0
        %v1473 = vadd.f32 %v1161, %v1472
        %v1474 = vpop.f32.mrf.mxu0
        %1475 = vmatprep.mubr.bf16.mxu0 0
        %1476 = vmatmul.mubr.bf16.gmra.mxu0 %v1137
        %v1477 = vpop.f32.mrf.mxu0
        %v1478 = vadd.f32 %v1161, %v1477
        %v1479 = vpop.f32.mrf.mxu0
        %v1480 = vpop.f32.mrf.mxu0
        %v1481 = vadd.f32 %v1161, %v1480
        %v1482 = vpop.f32.mrf.mxu0
        %1483 = vmatprep.mubr.bf16.mxu0 0
        %1484 = vmatmul.mubr.bf16.gmra.mxu0 %v1138
        %v1485 = vpop.f32.mrf.mxu0
        %v1486 = vadd.f32 %v1161, %v1485
        %v1487 = vpop.f32.mrf.mxu0
        %v1488 = vpop.f32.mrf.mxu0
        %v1489 = vadd.f32 %v1161, %v1488
        %v1490 = vpop.f32.mrf.mxu0
        %1491 = vmatprep.mubr.bf16.mxu0 0
        %1492 = vmatmul.mubr.bf16.gmra.mxu0 %v1139
        %v1493 = vpop.f32.mrf.mxu0
        %v1494 = vadd.f32 %v1161, %v1493
        %v1495 = vpop.f32.mrf.mxu0
        %v1496 = vpop.f32.mrf.mxu0
        %v1497 = vadd.f32 %v1161, %v1496
        %v1498 = vpop.f32.mrf.mxu0
        %1499 = vdwg.mxu0
        %1500 = vst [vmem:[%s218] sm:$0xff] %v1246
        %1501 = vst [vmem:[%s218 + $0x8] sm:$0xff] %v1249
        %1502 = vst [vmem:[%s218 + $0x10] sm:$0xff] %v1254
        %1503 = vst [vmem:[%s218 + $0x18] sm:$0xff] %v1257
        %1504 = vst [vmem:[%s218 + $0x20] sm:$0xff] %v1262
        %1505 = vst [vmem:[%s218 + $0x28] sm:$0xff] %v1265
        %1506 = vst [vmem:[%s218 + $0x30] sm:$0xff] %v1270
        %1507 = vst [vmem:[%s218 + $0x38] sm:$0xff] %v1273
        %1508 = vst [vmem:[%s218 + $0x40] sm:$0xff] %v1278
        %1509 = vst [vmem:[%s218 + $0x48] sm:$0xff] %v1281
        %1510 = vst [vmem:[%s218 + $0x50] sm:$0xff] %v1286
        %1511 = vst [vmem:[%s218 + $0x58] sm:$0xff] %v1289
        %1512 = vst [vmem:[%s218 + $0x60] sm:$0xff] %v1294
        %1513 = vst [vmem:[%s218 + $0x68] sm:$0xff] %v1297
        %1514 = vst [vmem:[%s218 + $0x70] sm:$0xff] %v1302
        %1515 = vst [vmem:[%s218 + $0x78] sm:$0xff] %v1305
        %1516 = vst [vmem:[%s218 + $0x80] sm:$0xff] %v1310
        %1517 = vst [vmem:[%s218 + $0x88] sm:$0xff] %v1313
        %1518 = vst [vmem:[%s218 + $0x90] sm:$0xff] %v1318
        %1519 = vst [vmem:[%s218 + $0x98] sm:$0xff] %v1321
        %1520 = vst [vmem:[%s218 + $0xa0] sm:$0xff] %v1326
        %1521 = vst [vmem:[%s218 + $0xa8] sm:$0xff] %v1329
        %1522 = vst [vmem:[%s218 + $0xb0] sm:$0xff] %v1334
        %1523 = vst [vmem:[%s218 + $0xb8] sm:$0xff] %v1337
        %1524 = vst [vmem:[%s218 + $0xc0] sm:$0xff] %v1342
        %1525 = vst [vmem:[%s218 + $0xc8] sm:$0xff] %v1345
        %1526 = vst [vmem:[%s218 + $0xd0] sm:$0xff] %v1350
        %1527 = vst [vmem:[%s218 + $0xd8] sm:$0xff] %v1353
        %1528 = vst [vmem:[%s218 + $0xe0] sm:$0xff] %v1358
        %1529 = vst [vmem:[%s218 + $0xe8] sm:$0xff] %v1361
        %1530 = vst [vmem:[%s218 + $0xf0] sm:$0xff] %v1366
        %1531 = vst [vmem:[%s218 + $0xf8] sm:$0xff] %v1369
        %1532 = vst [vmem:[%s218 + $0x100] sm:$0xff] %v1374
        %1533 = vst [vmem:[%s218 + $0x108] sm:$0xff] %v1377
        %1534 = vst [vmem:[%s218 + $0x110] sm:$0xff] %v1382
        %1535 = vst [vmem:[%s218 + $0x118] sm:$0xff] %v1385
        %1536 = vst [vmem:[%s218 + $0x120] sm:$0xff] %v1390
        %1537 = vst [vmem:[%s218 + $0x128] sm:$0xff] %v1393
        %1538 = vst [vmem:[%s218 + $0x130] sm:$0xff] %v1398
        %1539 = vst [vmem:[%s218 + $0x138] sm:$0xff] %v1401
        %1540 = vst [vmem:[%s218 + $0x140] sm:$0xff] %v1406
        %1541 = vst [vmem:[%s218 + $0x148] sm:$0xff] %v1409
        %1542 = vst [vmem:[%s218 + $0x150] sm:$0xff] %v1414
        %1543 = vst [vmem:[%s218 + $0x158] sm:$0xff] %v1417
        %1544 = vst [vmem:[%s218 + $0x160] sm:$0xff] %v1422
        %1545 = vst [vmem:[%s218 + $0x168] sm:$0xff] %v1425
        %1546 = vst [vmem:[%s218 + $0x170] sm:$0xff] %v1430
        %1547 = vst [vmem:[%s218 + $0x178] sm:$0xff] %v1433
        %1548 = vst [vmem:[%s218 + $0x180] sm:$0xff] %v1438
        %1549 = vst [vmem:[%s218 + $0x188] sm:$0xff] %v1441
        %1550 = vst [vmem:[%s218 + $0x190] sm:$0xff] %v1446
        %1551 = vst [vmem:[%s218 + $0x198] sm:$0xff] %v1449
        %1552 = vst [vmem:[%s218 + $0x1a0] sm:$0xff] %v1454
        %1553 = vst [vmem:[%s218 + $0x1a8] sm:$0xff] %v1457
        %1554 = vst [vmem:[%s218 + $0x1b0] sm:$0xff] %v1462
        %1555 = vst [vmem:[%s218 + $0x1b8] sm:$0xff] %v1465
        %1556 = vst [vmem:[%s218 + $0x1c0] sm:$0xff] %v1470
        %1557 = vst [vmem:[%s218 + $0x1c8] sm:$0xff] %v1473
        %1558 = vst [vmem:[%s218 + $0x1d0] sm:$0xff] %v1478
        %1559 = vst [vmem:[%s218 + $0x1d8] sm:$0xff] %v1481
        %1560 = vst [vmem:[%s218 + $0x1e0] sm:$0xff] %v1486
        %1561 = vst [vmem:[%s218 + $0x1e8] sm:$0xff] %v1489
        %1562 = vst [vmem:[%s218 + $0x1f0] sm:$0xff] %v1494
        %1563 = vst [vmem:[%s218 + $0x1f8] sm:$0xff] %v1497
        %s1564 = sand.u32 %s137, 1
        %s1565 = scalar_lea.sflag [#allocation3], %s1564
        %s1566 = sand.u32 %s137, 1
        %s1567 = smul.addr %s1566, 512
        %s1568 = scalar_lea.vmem [#allocation2], %s1567
        // Predicated region
        $region41: #{tpu_custom_call.1} parent=39 // pred_check
          %p1569 = pneg %p147
        $region42: #{tpu_custom_call.1} parent=39 // pred_check_branch
          %1571 = sbr.rel (%p1569) target = $region44
        $region43: #{tpu_custom_call.1} parent=39 // pred_region
          %s1572 = smul.u32 64, %s19
          %s1574 = ssub.s32 8192, 8192
          %1575 = vsyncadd %s1565, %s1574
          %s1576 = smul.addr %s1572, 128
          %s1577 = scalar_lea.hbm %s5, %s1576
          %s1578 = sshll.u32 %s1568, 4
          %s1579 = int_to_ptr.vmem [resolvable:$true] %s1578
          %1584 = dma.vmem_to_hbm [thread:$0]  %s1579, 8192, %s1577, %s1565, 128, 128, 8
        $region44: #{tpu_custom_call.1} parent=39 // pred_fallthru
          _
      $region40: #{tpu_custom_call.1} parent=5 // pred_fallthru
        _
      %p1585 = scmp.le.s32.totalorder 2, %s14
      // Predicated region
      $region45: #{tpu_custom_call.1} parent=5 // pred_check
        %p1586 = pneg %p1585
      $region46: #{tpu_custom_call.1} parent=5 // pred_check_branch
        %1588 = sbr.rel (%p1586) target = $region48
      $region47: #{tpu_custom_call.1} parent=5 // pred_region
        %s1589 = ssub.s32 %s14, 2
        // Predicated region
        $region49: #{tpu_custom_call.1} parent=47 // pred_check
          %p1590 = pneg %p153
        $region50: #{tpu_custom_call.1} parent=47 // pred_check_branch
          %1592 = sbr.rel (%p1590) target = $region52
        $region51: #{tpu_custom_call.1} parent=47 // pred_region
          %s1593 = sand.u32 %s138, 1
          %s1594 = scalar_lea.sflag [#allocation3], %s1593
          %s1595 = sand.u32 %s138, 1
          %s1596 = smul.addr %s1595, 512
          %s1597 = scalar_lea.vmem [#allocation2], %s1596
          %1598 = dma.done %s1594, 8192
        $region52: #{tpu_custom_call.1} parent=47 // pred_fallthru
          _
      $region48: #{tpu_custom_call.1} parent=5 // pred_fallthru
        _
    $region6: #{tpu_custom_call.1} parent=1 // loop_footer
      %s18 = sadd.s32 1, %s14
    $region7: #{tpu_custom_call.1} parent=1 // loop_footer_branch
      %13 = sbr.rel target = $region3
    $region8: #{tpu_custom_call.1} parent=1 // loop_exit
      _
    %1599 = vsyncpa [#allocation3], 1
    %s1600 = scalar_lea.sflag [#allocation3], 1
    %1601 = vsyncpa %s1600, 1

</llo_original>
